<compile_context>
chip_gen: v6e
topology: v6e:2x2x1
jax: 0.10.0
libtpu: 0.0.40
codegen_flags: <defaults>
</compile_context>

<pallas_src>
import functools

import jax
import jax.numpy as jnp
import numpy as np
from jax.experimental import pallas as pl
from jax.experimental.pallas import tpu as pltpu

VOCAB = 5000
EMB = 50            # embedding_dim
HID = 100           # conv out_channels / fc hidden
CH_PAD = 128        # lane-dense padding of the 50- and 100-wide channel dims
KSZ = 5             # Conv1d kernel_size

_FUSED_GATHER_OK = None   # cached: does the in-kernel gather lower on this toolchain?


def _round_up(x, m):
    return ((x + m - 1) // m) * m


# ----------------------------------------------------------------------------
# Kernels
# ----------------------------------------------------------------------------
def _attend(x, conv_w, consts, fc1_w, out_ref, *, lout_valid, compute_dtype):
    """Shared compute on a lane-padded (bb, l_pad, 128) embedding block."""
    bb, l_pad, ch = x.shape
    lout = l_pad - (KSZ - 1)            # multiple of 8 by construction
    conv_b = consts[0:1, :]             # (1, 128) f32
    fc1_b = consts[1:2, :]
    fc2_w = consts[2:3, :]

    # Conv1d(50->100, k=5): five accumulated K=128 matmuls on sublane-shifted
    # views (no im2col concatenate / masked lane stores; ceil(K/128)=1 per tap,
    # so the channel padding costs no extra MXU time).
    m = bb * lout
    acc = None
    for k in range(KSZ):
        xk = x[:, k:k + lout, :].reshape(m, ch)       # layout no-op (lout % 8 == 0)
        wk = conv_w[k * ch:(k + 1) * ch, :]           # 128-aligned static row slice
        d = jnp.dot(xk, wk, preferred_element_type=jnp.float32)
        acc = d if acc is None else acc + d
    f = acc + conv_b                                  # (m, 128) f32

    # weight = tanh(fc1(f)); matmul inputs in compute_dtype, accumulate in f32.
    h = jnp.tanh(jnp.dot(f.astype(compute_dtype), fc1_w,
                         preferred_element_type=jnp.float32) + fc1_b)

    f3 = f.reshape(bb, lout, ch)                      # layout no-op reshapes
    h3 = h.reshape(bb, lout, ch)

    # fc2 (out_features=1, no bias) as a VPU multiply + lane reduction.
    s = jnp.sum(h3 * fc2_w, axis=-1, keepdims=True)   # (bb, lout, 1) f32

    # softmax over the sequence axis (PyTorch dim=0 of (L-4, B, 1)); padded
    # sequence positions (lout_valid <= t < lout) get exactly zero weight.
    if lout_valid < lout:
        pos = jax.lax.broadcasted_iota(jnp.int32, (1, lout, 1), 1)
        valid = pos < lout_valid
        mx = jnp.max(jnp.where(valid, s, jnp.float32(-1e30)), axis=1, keepdims=True)
        e = jnp.where(valid, jnp.exp(s - mx), jnp.float32(0.0))
    else:
        mx = jnp.max(s, axis=1, keepdims=True)
        e = jnp.exp(s - mx)
    # approx=False keeps ~1e-4 parity with the f32 reference.
    p = e * pl.reciprocal(jnp.sum(e, axis=1, keepdims=True), approx=False)

    # weighted sum over the sequence -> (bb, 128), lane/sublane-dense store.
    out_ref[0] = jnp.sum(p * f3, axis=1)


def _word_att_kernel_fused(ids_ref, tab_ref, convw_ref, consts_ref, fc1w_ref,
                           out_ref, *, lout_valid, compute_dtype):
    # Embedding gather fused into the kernel: the lane-padded (5000, 128) table
    # stays VMEM-resident (constant index_map -> fetched once) and the
    # (bb, l_pad) int32 ids block is gathered directly, so the (B, L, 50)
    # activation never round-trips HBM.
    bb, l_pad = ids_ref.shape
    idx = ids_ref[...].reshape(bb * l_pad)
    x = jnp.take(tab_ref[...], idx, axis=0, mode="promise_in_bounds")
    x = x.reshape(bb, l_pad, CH_PAD)                  # layout no-op (l_pad % 8 == 0)
    _attend(x, convw_ref[...], consts_ref[...], fc1w_ref[...], out_ref,
            lout_valid=lout_valid, compute_dtype=compute_dtype)


def _word_att_kernel_pregathered(emb_ref, convw_ref, consts_ref, fc1w_ref,
                                 out_ref, *, lout_valid, compute_dtype):
    # Fallback when the in-kernel gather does not lower on this toolchain: the
    # wrapper gathers a 50-channel-wide block (minimal HBM bytes); lane-pad
    # 50 -> 128 here (a cheap per-vreg select, no extra HBM traffic).
    x = emb_ref[...]
    bb, l_pad, _ = x.shape
    x = jnp.concatenate(
        [x, jnp.zeros((bb, l_pad, CH_PAD - EMB), dtype=x.dtype)], axis=-1)
    _attend(x, convw_ref[...], consts_ref[...], fc1w_ref[...], out_ref,
            lout_valid=lout_valid, compute_dtype=compute_dtype)


# ----------------------------------------------------------------------------
# Wrapper
# ----------------------------------------------------------------------------
def _prep_params(conv_w, conv_b, fc1_w, fc1_b, fc2_w, compute_dtype):
    # Conv weight (O=100, I=50, K=5) -> (K, I, O) -> pad I,O -> (K*128, 128).
    cw = jnp.transpose(conv_w.astype(jnp.float32), (2, 1, 0))
    cw = jnp.pad(cw, ((0, 0), (0, CH_PAD - EMB), (0, CH_PAD - HID)))
    cw = cw.reshape(KSZ * CH_PAD, CH_PAD).astype(compute_dtype)
    # fc1 weight (out, in) -> (in, out), padded to (128, 128).
    f1 = jnp.pad(fc1_w.T.astype(jnp.float32),
                 ((0, CH_PAD - HID), (0, CH_PAD - HID))).astype(compute_dtype)
    # Pack the three small row operands into ONE (8, 128) f32 block (one DMA):
    #   row 0: conv bias, row 1: fc1 bias, row 2: fc2 weight row.
    consts = jnp.zeros((8, CH_PAD), jnp.float32)
    consts = consts.at[0, :HID].set(conv_b.reshape(-1).astype(jnp.float32))
    consts = consts.at[1, :HID].set(fc1_b.reshape(-1).astype(jnp.float32))
    consts = consts.at[2, :HID].set(fc2_w.reshape(-1).astype(jnp.float32))
    return cw, consts, f1


def _vmem_bytes(bb, l_pad, lout_pad, itemsize):
    """Rough per-grid-step VMEM footprint (fused path; upper bound for both)."""
    x = bb * l_pad * CH_PAD * itemsize                   # gathered / lane-padded emb
    shifted = 2 * bb * lout_pad * CH_PAD * itemsize      # live shifted conv views
    fh = 2 * bb * lout_pad * CH_PAD * 4                  # f and h (f32)
    soft = 4 * bb * lout_pad * 4                         # s / e / p and friends
    ins = 2 * bb * l_pad * 4 + 2 * VOCAB * CH_PAD * itemsize   # ids + table (x2 bufs)
    w = 2 * (KSZ * CH_PAD * CH_PAD + CH_PAD * CH_PAD + 8 * CH_PAD) * itemsize
    outs = 2 * bb * CH_PAD * 4
    return x + shifted + fh + soft + ins + w + outs


_VMEM_BLOCK_CAP = 40 * 1024 * 1024   # keep per-step footprint well inside v7x's 64 MiB


def _pick_block_b(batch, l_pad, lout_pad, itemsize):
    b_pad8 = _round_up(batch, 8)
    # Target ~1024 conv rows (block_b * lout_pad) per grid step: amortizes the
    # ~0.35us/step pipeline overhead, keeps the per-step DMA at O(0.5-2 MB) and
    # the MXU M dimension well above 256.
    bb = _round_up(max(8, -(-1024 // lout_pad)), 8)
    bb = min(bb, b_pad8)
    # v7x has 2 TensorCores: keep >= 2 grid steps when the batch allows it so
    # the 'parallel' axis can shard across both cores (free on v5e/v6e).
    if bb >= b_pad8 and b_pad8 >= 16:
        bb = _round_up(b_pad8 // 2, 8)
    # Cap block_b so the estimated per-step VMEM footprint stays under the cap.
    while bb > 8 and _vmem_bytes(bb, l_pad, lout_pad, itemsize) > _VMEM_BLOCK_CAP:
        bb -= 8
    return bb


def word_att_forward(ids, emb_table, conv_w, conv_b, fc1_w, fc1_b, fc2_w, *,
                     block_b=None, compute_dtype=jnp.float32, fuse_gather="auto"):
    """WordAttNet forward.  ids: (B, L) int32.  Returns (1, B, 100) float32.

    compute_dtype=jnp.bfloat16 halves emb/table DMA bytes and doubles MXU
    throughput on v6e/v7x (accumulation and all elementwise stay f32; parity
    with the f32 PyTorch reference loosens from ~1e-4 to ~1e-2).
    fuse_gather: "auto" (try the in-kernel gather, fall back if it does not
    lower), True (require it), or False (wrapper-side gather).
    """
    global _FUSED_GATHER_OK
    B, L = ids.shape
    lout = L - (KSZ - 1)
    assert lout >= 1, "sequence length must be >= kernel size (5)"

    # Pad the sequence so both Lout and L_pad are multiples of 8: every
    # (BB, Lout, C) <-> (BB*Lout, C) reshape in the kernel is a layout no-op.
    lout_pad = _round_up(lout, 8)
    l_pad = _round_up(lout_pad + (KSZ - 1), 8)

    itemsize = jnp.dtype(compute_dtype).itemsize
    if block_b is None:
        block_b = _pick_block_b(B, l_pad, lout_pad, itemsize)
    else:
        block_b = _round_up(int(block_b), 8)
    n_blocks = pl.cdiv(B, block_b)
    b_pad = n_blocks * block_b

    cw, consts, f1 = _prep_params(conv_w, conv_b, fc1_w, fc1_b, fc2_w, compute_dtype)
    ids_pad = jnp.pad(ids.astype(jnp.int32), ((0, b_pad - B), (0, l_pad - L)))

    # Explicit VMEM budget: v7x has 64 MiB (32 MiB scoped default), v5e's scoped
    # default is only 16 MiB -- size from the estimated footprint, cap at 48 MiB.
    # TODO(synk): very long sequences (footprint > cap even at block_b=8) would
    # need a sequence-blocked grid with an online softmax.
    est = _vmem_bytes(block_b, l_pad, lout_pad, itemsize)
    vmem_limit = int(min(48 * 1024 * 1024, max(est + (4 << 20), 16 << 20)))

    cparams = pltpu.CompilerParams(dimension_semantics=("parallel",),
                                   vmem_limit_bytes=vmem_limit)
    out_shape = jax.ShapeDtypeStruct((1, b_pad, CH_PAD), jnp.float32)
    out_spec = pl.BlockSpec((1, block_b, CH_PAD), lambda b: (0, b, 0))
    weight_specs = [
        pl.BlockSpec((KSZ * CH_PAD, CH_PAD), lambda b: (0, 0)),    # conv weight (640,128)
        pl.BlockSpec((8, CH_PAD), lambda b: (0, 0)),               # packed biases / fc2
        pl.BlockSpec((CH_PAD, CH_PAD), lambda b: (0, 0)),          # fc1 weight
    ]

    def _run_fused():
        table = jnp.pad(emb_table.astype(jnp.float32),
                        ((0, 0), (0, CH_PAD - EMB))).astype(compute_dtype)
        kern = functools.partial(_word_att_kernel_fused,
                                 lout_valid=lout, compute_dtype=compute_dtype)
        return pl.pallas_call(
            kern,
            out_shape=out_shape,
            grid=(n_blocks,),
            in_specs=[pl.BlockSpec((block_b, l_pad), lambda b: (b, 0)),
                      pl.BlockSpec((VOCAB, CH_PAD), lambda b: (0, 0))] + weight_specs,
            out_specs=out_spec,
            compiler_params=cparams,
        )(ids_pad, table, cw, consts, f1)

    def _run_pregathered():
        # TODO(synk): wrapper-side (XLA) embedding gather -- the gathered
        # activation round-trips HBM once; only used when the fused in-kernel
        # gather does not lower on the running toolchain.
        emb = jnp.take(emb_table.astype(compute_dtype), ids_pad, axis=0)
        kern = functools.partial(_word_att_kernel_pregathered,
                                 lout_valid=lout, compute_dtype=compute_dtype)
        return pl.pallas_call(
            kern,
            out_shape=out_shape,
            grid=(n_blocks,),
            in_specs=[pl.BlockSpec((block_b, l_pad, EMB), lambda b: (b, 0, 0))]
                     + weight_specs,
            out_specs=out_spec,
            compiler_params=cparams,
        )(emb, cw, consts, f1)

    out = None
    if fuse_gather is True or (fuse_gather == "auto" and _FUSED_GATHER_OK is not False):
        try:
            out = jax.block_until_ready(_run_fused())
            _FUSED_GATHER_OK = True
        except Exception:
            if fuse_gather is True:
                raise
            _FUSED_GATHER_OK = False
    if out is None:
        out = _run_pregathered()

    # Drop batch / channel padding: (1, b_pad, 128) -> (1, B, 100).
    return out[:, :B, :HID]


# ----------------------------------------------------------------------------
# Pure-JAX reference (mirrors the PyTorch code path exactly, f32)
# ----------------------------------------------------------------------------
def word_att_reference(ids, emb_table, conv_w, conv_b, fc1_w, fc1_b, fc2_w):
    emb = jnp.take(emb_table, ids, axis=0).astype(jnp.float32)      # (B, L, 50)
    x = jnp.transpose(emb, (0, 2, 1))                               # (B, 50, L)
    f = jax.lax.conv_general_dilated(
        x, conv_w.astype(jnp.float32), window_strides=(1,), padding="VALID",
        dimension_numbers=("NCH", "OIH", "NCH")) + conv_b.reshape(1, HID, 1)
    f = jnp.transpose(f, (2, 0, 1))                                 # (L-4, B, 100)
    w = jnp.tanh(jnp.einsum("tbi,oi->tbo", f, fc1_w) + fc1_b)
    w = jnp.einsum("tbi,oi->tbo", w, fc2_w)                         # (L-4, B, 1)
    w = jax.nn.softmax(w, axis=0)
    return jnp.sum(w * f, axis=0)[None]                             # (1, B, 100)


if __name__ == "__main__":
    B, L = 13, 16
    key = jax.random.PRNGKey(0)
    k_emb, k_cw, k_cb, k_f1w, k_f1b, k_f2w, k_ids = jax.random.split(key, 7)

    emb_table = jax.random.normal(k_emb, (VOCAB, EMB), jnp.float32) * 0.1
    conv_w = jax.random.normal(k_cw, (HID, EMB, KSZ), jnp.float32) * 0.05
    conv_b = jax.random.normal(k_cb, (HID,), jnp.float32) * 0.05
    fc1_w = jax.random.normal(k_f1w, (HID, HID), jnp.float32) * 0.05
    fc1_b = jax.random.normal(k_f1b, (HID,), jnp.float32) * 0.05
    fc2_w = jax.random.normal(k_f2w, (1, HID), jnp.float32) * 0.05
    ids = jax.random.randint(k_ids, (B, L), 0, VOCAB, dtype=jnp.int32)

    ref = word_att_reference(ids, emb_table, conv_w, conv_b, fc1_w, fc1_b, fc2_w)

    # Explicit 2-block grid (batch padded 13 -> 16), f32 parity path.
    out = word_att_forward(ids, emb_table, conv_w, conv_b, fc1_w, fc1_b, fc2_w,
                           block_b=8)
    out = jax.block_until_ready(out)
    assert out.shape == (1, B, HID), out.shape
    np.testing.assert_allclose(np.asarray(out), np.asarray(ref), rtol=1e-4, atol=1e-4)

    # Auto block sizing (DMA-volume / megacore heuristic).
    out2 = word_att_forward(ids, emb_table, conv_w, conv_b, fc1_w, fc1_b, fc2_w)
    out2 = jax.block_until_ready(out2)
    np.testing.assert_allclose(np.asarray(out2), np.asarray(ref), rtol=1e-4, atol=1e-4)

    # bf16 MXU path (recommended on v6e / v7x); looser parity by design.
    out3 = word_att_forward(ids, emb_table, conv_w, conv_b, fc1_w, fc1_b, fc2_w,
                            compute_dtype=jnp.bfloat16)
    out3 = jax.block_until_ready(out3)
    np.testing.assert_allclose(np.asarray(out3), np.asarray(ref), rtol=2e-2, atol=2e-2)

    print("KERNEL_OK")
</pallas_src>

<mosaic_0001>
module attributes {stable_mosaic.version = 11 : i64} {
  func.func @_word_att_kernel_pregathered(%arg0: i32, %arg1: memref<8x24x50xf32, #tpu.memory_space<vmem>>, %arg2: memref<640x128xf32, #tpu.memory_space<vmem>>, %arg3: memref<8x128xf32, #tpu.memory_space<vmem>>, %arg4: memref<128x128xf32, #tpu.memory_space<vmem>>, %arg5: memref<1x8x128xf32, #tpu.memory_space<vmem>>) attributes {dimension_semantics = [#tpu.dimension_semantics<parallel>], iteration_bounds = array<i64: 2>, scalar_prefetch = 0 : i64, scratch_operands = 0 : i64, tpu.core_type = #tpu.core_type<tc>, window_params = [{transform_indices = @transform_0, window_bounds = array<i64: 8, 24, 50>}, {pipeline_mode = #tpu.pipeline_mode<synchronous>, transform_indices = @transform_1, window_bounds = array<i64: 640, 128>}, {pipeline_mode = #tpu.pipeline_mode<synchronous>, transform_indices = @transform_2, window_bounds = array<i64: 8, 128>}, {pipeline_mode = #tpu.pipeline_mode<synchronous>, transform_indices = @transform_3, window_bounds = array<i64: 128, 128>}, {transform_indices = @transform_4, window_bounds = array<i64: 1, 8, 128>}]} {
    %c0 = arith.constant 0 : index
    %c0_0 = arith.constant 0 : index
    %c0_1 = arith.constant 0 : index
    %0 = vector.load %arg1[%c0, %c0_0, %c0_1] : memref<8x24x50xf32, #tpu.memory_space<vmem>>, vector<8x24x50xf32>
    %cst = arith.constant 0.000000e+00 : f32
    %1 = vector.broadcast %cst : f32 to vector<8x24x78xf32>
    %2 = tpu.concatenate %0, %1 in 2 : vector<8x24x50xf32>, vector<8x24x78xf32> -> vector<8x24x128xf32>
    %c0_2 = arith.constant 0 : index
    %c0_3 = arith.constant 0 : index
    %3 = vector.load %arg2[%c0_2, %c0_3] : memref<640x128xf32, #tpu.memory_space<vmem>>, vector<640x128xf32>
    %c0_4 = arith.constant 0 : index
    %c0_5 = arith.constant 0 : index
    %4 = vector.load %arg3[%c0_4, %c0_5] : memref<8x128xf32, #tpu.memory_space<vmem>>, vector<8x128xf32>
    %c0_6 = arith.constant 0 : index
    %c0_7 = arith.constant 0 : index
    %5 = vector.load %arg4[%c0_6, %c0_7] : memref<128x128xf32, #tpu.memory_space<vmem>>, vector<128x128xf32>
    %6 = vector.extract_strided_slice %4 {offsets = [0, 0], sizes = [1, 128], strides = [1, 1]} : vector<8x128xf32> to vector<1x128xf32>
    %7 = vector.extract_strided_slice %4 {offsets = [1, 0], sizes = [1, 128], strides = [1, 1]} : vector<8x128xf32> to vector<1x128xf32>
    %8 = vector.extract_strided_slice %4 {offsets = [2, 0], sizes = [1, 128], strides = [1, 1]} : vector<8x128xf32> to vector<1x128xf32>
    %9 = vector.extract_strided_slice %2 {offsets = [0, 0, 0], sizes = [8, 20, 128], strides = [1, 1, 1]} : vector<8x24x128xf32> to vector<8x20x128xf32>
    %10 = vector.shape_cast %9 : vector<8x20x128xf32> to vector<160x128xf32>
    %11 = vector.extract_strided_slice %3 {offsets = [0, 0], sizes = [128, 128], strides = [1, 1]} : vector<640x128xf32> to vector<128x128xf32>
    %cst_8 = arith.constant dense<0.000000e+00> : vector<160x128xf32>
    %12 = tpu.matmul %10, %11, %cst_8 {dimension_numbers = #tpu.dot_dimension_numbers<[1], [0], [0], [1], [0, 0, 1, 1], [], []>} : vector<160x128xf32>, vector<128x128xf32>, vector<160x128xf32> -> vector<160x128xf32>
    %13 = vector.extract_strided_slice %2 {offsets = [0, 1, 0], sizes = [8, 20, 128], strides = [1, 1, 1]} : vector<8x24x128xf32> to vector<8x20x128xf32>
    %14 = vector.shape_cast %13 : vector<8x20x128xf32> to vector<160x128xf32>
    %15 = vector.extract_strided_slice %3 {offsets = [128, 0], sizes = [128, 128], strides = [1, 1]} : vector<640x128xf32> to vector<128x128xf32>
    %cst_9 = arith.constant dense<0.000000e+00> : vector<160x128xf32>
    %16 = tpu.matmul %14, %15, %cst_9 {dimension_numbers = #tpu.dot_dimension_numbers<[1], [0], [0], [1], [0, 0, 1, 1], [], []>} : vector<160x128xf32>, vector<128x128xf32>, vector<160x128xf32> -> vector<160x128xf32>
    %17 = arith.addf %12, %16 : vector<160x128xf32>
    %18 = vector.extract_strided_slice %2 {offsets = [0, 2, 0], sizes = [8, 20, 128], strides = [1, 1, 1]} : vector<8x24x128xf32> to vector<8x20x128xf32>
    %19 = vector.shape_cast %18 : vector<8x20x128xf32> to vector<160x128xf32>
    %20 = vector.extract_strided_slice %3 {offsets = [256, 0], sizes = [128, 128], strides = [1, 1]} : vector<640x128xf32> to vector<128x128xf32>
    %cst_10 = arith.constant dense<0.000000e+00> : vector<160x128xf32>
    %21 = tpu.matmul %19, %20, %cst_10 {dimension_numbers = #tpu.dot_dimension_numbers<[1], [0], [0], [1], [0, 0, 1, 1], [], []>} : vector<160x128xf32>, vector<128x128xf32>, vector<160x128xf32> -> vector<160x128xf32>
    %22 = arith.addf %17, %21 : vector<160x128xf32>
    %23 = vector.extract_strided_slice %2 {offsets = [0, 3, 0], sizes = [8, 20, 128], strides = [1, 1, 1]} : vector<8x24x128xf32> to vector<8x20x128xf32>
    %24 = vector.shape_cast %23 : vector<8x20x128xf32> to vector<160x128xf32>
    %25 = vector.extract_strided_slice %3 {offsets = [384, 0], sizes = [128, 128], strides = [1, 1]} : vector<640x128xf32> to vector<128x128xf32>
    %cst_11 = arith.constant dense<0.000000e+00> : vector<160x128xf32>
    %26 = tpu.matmul %24, %25, %cst_11 {dimension_numbers = #tpu.dot_dimension_numbers<[1], [0], [0], [1], [0, 0, 1, 1], [], []>} : vector<160x128xf32>, vector<128x128xf32>, vector<160x128xf32> -> vector<160x128xf32>
    %27 = arith.addf %22, %26 : vector<160x128xf32>
    %28 = vector.extract_strided_slice %2 {offsets = [0, 4, 0], sizes = [8, 20, 128], strides = [1, 1, 1]} : vector<8x24x128xf32> to vector<8x20x128xf32>
    %29 = vector.shape_cast %28 : vector<8x20x128xf32> to vector<160x128xf32>
    %30 = vector.extract_strided_slice %3 {offsets = [512, 0], sizes = [128, 128], strides = [1, 1]} : vector<640x128xf32> to vector<128x128xf32>
    %cst_12 = arith.constant dense<0.000000e+00> : vector<160x128xf32>
    %31 = tpu.matmul %29, %30, %cst_12 {dimension_numbers = #tpu.dot_dimension_numbers<[1], [0], [0], [1], [0, 0, 1, 1], [], []>} : vector<160x128xf32>, vector<128x128xf32>, vector<160x128xf32> -> vector<160x128xf32>
    %32 = arith.addf %27, %31 : vector<160x128xf32>
    %33 = vector.broadcast %6 : vector<1x128xf32> to vector<160x128xf32>
    %34 = arith.addf %32, %33 : vector<160x128xf32>
    %cst_13 = arith.constant dense<0.000000e+00> : vector<160x128xf32>
    %35 = tpu.matmul %34, %5, %cst_13 {dimension_numbers = #tpu.dot_dimension_numbers<[1], [0], [0], [1], [0, 0, 1, 1], [], []>} : vector<160x128xf32>, vector<128x128xf32>, vector<160x128xf32> -> vector<160x128xf32>
    %36 = vector.broadcast %7 : vector<1x128xf32> to vector<160x128xf32>
    %37 = arith.addf %35, %36 : vector<160x128xf32>
    %38 = math.tanh %37 : vector<160x128xf32>
    %39 = vector.shape_cast %34 : vector<160x128xf32> to vector<8x20x128xf32>
    %40 = vector.shape_cast %38 : vector<160x128xf32> to vector<8x20x128xf32>
    %41 = vector.shape_cast %8 : vector<1x128xf32> to vector<1x1x128xf32>
    %42 = vector.broadcast %41 : vector<1x1x128xf32> to vector<8x20x128xf32>
    %43 = arith.mulf %40, %42 : vector<8x20x128xf32>
    %cst_14 = arith.constant dense<0.000000e+00> : vector<8x20xf32>
    %44 = vector.multi_reduction <add>, %43, %cst_14 [2] : vector<8x20x128xf32> to vector<8x20xf32>
    %45 = vector.shape_cast %44 : vector<8x20xf32> to vector<8x20x1xf32>
    %46 = tpu.iota {dimensions = array<i32: 1>} : vector<1x20x1xi32>
    %c12_i32 = arith.constant 12 : i32
    %47 = vector.broadcast %c12_i32 : i32 to vector<1x20x1xi32>
    %48 = arith.cmpi slt, %46, %47 : vector<1x20x1xi32>
    %cst_15 = arith.constant -1.000000e+30 : f32
    %49 = vector.shape_cast %48 : vector<1x20x1xi1> to vector<1x20x1xi1>
    %50 = vector.broadcast %49 : vector<1x20x1xi1> to vector<8x20x1xi1>
    %51 = vector.broadcast %cst_15 : f32 to vector<8x20x1xf32>
    %52 = arith.select %50, %45, %51 : vector<8x20x1xi1>, vector<8x20x1xf32>
    %cst_16 = arith.constant dense<0xFF800000> : vector<8x1xf32>
    %53 = vector.multi_reduction <maximumf>, %52, %cst_16 [1] : vector<8x20x1xf32> to vector<8x1xf32>
    %54 = vector.shape_cast %53 : vector<8x1xf32> to vector<8x1x1xf32>
    %55 = vector.broadcast %54 : vector<8x1x1xf32> to vector<8x20x1xf32>
    %56 = arith.subf %45, %55 : vector<8x20x1xf32>
    %57 = math.exp %56 : vector<8x20x1xf32>
    %cst_17 = arith.constant 0.000000e+00 : f32
    %58 = vector.shape_cast %48 : vector<1x20x1xi1> to vector<1x20x1xi1>
    %59 = vector.broadcast %58 : vector<1x20x1xi1> to vector<8x20x1xi1>
    %60 = vector.broadcast %cst_17 : f32 to vector<8x20x1xf32>
    %61 = arith.select %59, %57, %60 : vector<8x20x1xi1>, vector<8x20x1xf32>
    %cst_18 = arith.constant dense<0.000000e+00> : vector<8x1xf32>
    %62 = vector.multi_reduction <add>, %61, %cst_18 [1] : vector<8x20x1xf32> to vector<8x1xf32>
    %63 = vector.shape_cast %62 : vector<8x1xf32> to vector<8x1x1xf32>
    %64 = tpu.reciprocal %63 : vector<8x1x1xf32> -> vector<8x1x1xf32>
    %65 = vector.broadcast %64 : vector<8x1x1xf32> to vector<8x20x1xf32>
    %66 = arith.mulf %61, %65 : vector<8x20x1xf32>
    %67 = vector.broadcast %66 : vector<8x20x1xf32> to vector<8x20x128xf32>
    %68 = arith.mulf %67, %39 : vector<8x20x128xf32>
    %cst_19 = arith.constant dense<0.000000e+00> : vector<8x128xf32>
    %69 = vector.multi_reduction <add>, %68, %cst_19 [1] : vector<8x20x128xf32> to vector<8x128xf32>
    %c0_20 = arith.constant 0 : index
    %c0_21 = arith.constant 0 : index
    %c0_22 = arith.constant 0 : index
    %70 = vector.load %arg5[%c0_20, %c0_21, %c0_22] : memref<1x8x128xf32, #tpu.memory_space<vmem>>, vector<1x8x128xf32>
    %71 = vector.shape_cast %70 : vector<1x8x128xf32> to vector<8x128xf32>
    %72 = vector.shape_cast %69 : vector<8x128xf32> to vector<1x8x128xf32>
    tpu.vector_store %arg5[%c0_20, %c0_21, %c0_22], %72 {strides = array<i32>} : memref<1x8x128xf32, #tpu.memory_space<vmem>>, vector<1x8x128xf32>,
    return
  }
  func.func @transform_0(%arg0: i32) -> (i32, i32, i32) {
    %c0_i32 = arith.constant 0 : i32
    %c0_i32_0 = arith.constant 0 : i32
    %c0_i32_1 = arith.constant 0 : i32
    return %arg0, %c0_i32, %c0_i32_0 : i32, i32, i32
  }
  func.func @transform_1(%arg0: i32) -> (i32, i32) {
    %c0_i32 = arith.constant 0 : i32
    %c0_i32_0 = arith.constant 0 : i32
    %c0_i32_1 = arith.constant 0 : i32
    return %c0_i32, %c0_i32_0 : i32, i32
  }
  func.func @transform_2(%arg0: i32) -> (i32, i32) {
    %c0_i32 = arith.constant 0 : i32
    %c0_i32_0 = arith.constant 0 : i32
    %c0_i32_1 = arith.constant 0 : i32
    return %c0_i32, %c0_i32_0 : i32, i32
  }
  func.func @transform_3(%arg0: i32) -> (i32, i32) {
    %c0_i32 = arith.constant 0 : i32
    %c0_i32_0 = arith.constant 0 : i32
    %c0_i32_1 = arith.constant 0 : i32
    return %c0_i32, %c0_i32_0 : i32, i32
  }
  func.func @transform_4(%arg0: i32) -> (i32, i32, i32) {
    %c0_i32 = arith.constant 0 : i32
    %c0_i32_0 = arith.constant 0 : i32
    %c0_i32_1 = arith.constant 0 : i32
    return %c0_i32, %arg0, %c0_i32_0 : i32, i32, i32
  }
}

</mosaic_0001>

<llo_original>
// kernel: tpu_custom_call.1
$region0: #{tpu_custom_call.1}
  #allocation0 [shape = 'u32[]', space=smem, size = 0x4, offset = 0x4, fixed_abs, tag = 'smem constant byte address 0x4 - core index']
  #allocation1 [shape = 'u32[144,128]{1,0:T(1,128)}', space=vmem, size = 0x12000, scoped, tag = 'internal scratch']
  %s0 = inlined_call_operand.hbm [shape: f32[16,24,50], index: 0, kind: input, shape index: {}]
  %s1 = inlined_call_operand.hbm [shape: f32[640,128], index: 1, kind: input, shape index: {}]
  %s2 = inlined_call_operand.hbm [shape: f32[8,128], index: 2, kind: input, shape index: {}]
  %s3 = inlined_call_operand.hbm [shape: f32[128,128], index: 3, kind: input, shape index: {}]
  %s4 = inlined_call_operand.hbm [shape: f32[1,16,128], index: 4, kind: output, shape index: {}]
  %s5 = sld [smem:[#allocation0]]
  $region65: #{tpu_custom_call.1} parent=0
    _
  %s7 = ssub.s32 1, %s5
  %s8 = scalar_select 0, %s7, %s5
  $region1: #{tpu_custom_call.1} parent=0
    #allocation2 [shape = 'u8[196608]{0}', space=vmem, size = 0x30000, scoped, tag = 'input window, operand 0']
    #allocation3 [shape = 's32[2]{0}', space=sflag, size = 0x8, scoped, tag = 'scoped memory for tpu_custom_call.1']
    #allocation4 [shape = 's32[2]{0}', space=sflag, size = 0x8, scoped, tag = 'scoped memory for tpu_custom_call.1']
    #allocation5 [shape = 'u8[327680]{0}', space=vmem, size = 0x50000, scoped, tag = 'input window, operand 1, single buffered']
    #allocation6 [shape = 's32[1]{0}', space=sflag, size = 0x4, scoped, tag = 'scoped memory for tpu_custom_call.1']
    #allocation7 [shape = 'u8[4096]{0}', space=vmem, size = 0x1000, scoped, tag = 'input window, operand 2, single buffered']
    #allocation8 [shape = 'u8[65536]{0}', space=vmem, size = 0x10000, scoped, tag = 'input window, operand 3, single buffered']
    #allocation9 [shape = 's32[1]{0}', space=sflag, size = 0x4, scoped, tag = 'scoped memory for tpu_custom_call.1']
    #allocation10 [shape = 'u8[8192]{0}', space=vmem, size = 0x2000, scoped, tag = 'output window, operand 0']
    %9 = vsyncpa [#allocation3], 0
    %s10 = scalar_lea.sflag [#allocation3], 1
    %11 = vsyncpa %s10, 0
    %12 = vsyncpa [#allocation6], 0
    %13 = vsyncpa [#allocation9], 0
    %14 = vsyncpa [#allocation4], 0
    %s15 = scalar_lea.sflag [#allocation4], 1
    %16 = vsyncpa %s15, 0
    loop: start=0, step=1, limit=4
    $region2: #{tpu_custom_call.1} parent=1 // loop_pre_header
      _
    $region3: #{tpu_custom_call.1} parent=1 // loop_header
      %s18 = sphi 0, %s22
      %p19 = scmp.ge.s32.totalorder %s18, 4
      %s28 = sphi 0, %s30
      %s31 = sphi 0, %s28
      %s32 = sphi 0, %s31
      %s48 = sphi 0, %s32
      %s52 = sphi 0, %s52
      %s54 = sphi 0, %s52
      %s55 = sphi 0, %s54
      %s69 = sphi 0, %s55
      %s73 = sphi 0, %s73
      %s75 = sphi 0, %s73
      %s76 = sphi 0, %s75
      %s90 = sphi 0, %s76
      %s94 = sphi 0, %s94
      %s96 = sphi 0, %s94
      %s97 = sphi 0, %s96
      %s111 = sphi 0, %s97
      %s117 = sphi 0, %s119
      %s120 = sphi 0, %s117
      %s121 = sphi 0, %s120
      %s137 = sphi 0, %s121
    $region4: #{tpu_custom_call.1} parent=1 // loop_header_branch
      %21 = sbr.rel (%p19) target = $region8
    $region5: #{tpu_custom_call.1} parent=1 // loop_body
      %s23 = ssub.s32 %s18, 1
      %s24 = ssub.s32 %s18, 2
      %s25 = sadd.s32 %s18, 1
      %s26 = ssub.s32 %s18, %s25
      %p27 = scmp.eq.s32.totalorder %s26, 0
      %s29 = sadd.s32 %s28, 1
      %s30 = scalar_select %p27, %s28, %s29
      %p33 = pneg %p27
      %p34 = scmp.eq.s32.totalorder %s18, 1
      %p35 = por %p33, %p34
      %p36 = scmp.ne.s32.totalorder %s28, %s31
      %p37 = scmp.eq.s32.totalorder %s18, 0
      %p38 = por %p36, %p37
      %p39 = scmp.ne.s32.totalorder %s28, %s31
      %p40 = scmp.eq.s32.totalorder %s23, 1
      %p41 = por %p39, %p40
      %p42 = scmp.ne.s32.totalorder %s31, %s32
      %p43 = scmp.eq.s32.totalorder %s23, 0
      %p44 = por %p42, %p43
      %p45 = scmp.ne.s32.totalorder %s31, %s32
      %p46 = scmp.eq.s32.totalorder %s24, 1
      %p47 = por %p45, %p46
      %p49 = scmp.ne.s32.totalorder %s32, %s48
      %p50 = scmp.eq.s32.totalorder %s24, 0
      %p51 = por %p49, %p50
      %s53 = sadd.s32 %s52, 1
      %p56 = scmp.eq.s32.totalorder %s18, 1
      %p57 = scmp.ne.s32.totalorder %s52, %s54
      %p58 = scmp.eq.s32.totalorder %s18, 0
      %p59 = por %p57, %p58
      %p60 = scmp.ne.s32.totalorder %s52, %s54
      %p61 = scmp.eq.s32.totalorder %s23, 1
      %p62 = por %p60, %p61
      %p63 = scmp.ne.s32.totalorder %s54, %s55
      %p64 = scmp.eq.s32.totalorder %s23, 0
      %p65 = por %p63, %p64
      %p66 = scmp.ne.s32.totalorder %s54, %s55
      %p67 = scmp.eq.s32.totalorder %s24, 1
      %p68 = por %p66, %p67
      %p70 = scmp.ne.s32.totalorder %s55, %s69
      %p71 = scmp.eq.s32.totalorder %s24, 0
      %p72 = por %p70, %p71
      %s74 = sadd.s32 %s73, 1
      %p77 = scmp.eq.s32.totalorder %s18, 1
      %p78 = scmp.ne.s32.totalorder %s73, %s75
      %p79 = scmp.eq.s32.totalorder %s18, 0
      %p80 = por %p78, %p79
      %p81 = scmp.ne.s32.totalorder %s73, %s75
      %p82 = scmp.eq.s32.totalorder %s23, 1
      %p83 = por %p81, %p82
      %p84 = scmp.ne.s32.totalorder %s75, %s76
      %p85 = scmp.eq.s32.totalorder %s23, 0
      %p86 = por %p84, %p85
      %p87 = scmp.ne.s32.totalorder %s75, %s76
      %p88 = scmp.eq.s32.totalorder %s24, 1
      %p89 = por %p87, %p88
      %p91 = scmp.ne.s32.totalorder %s76, %s90
      %p92 = scmp.eq.s32.totalorder %s24, 0
      %p93 = por %p91, %p92
      %s95 = sadd.s32 %s94, 1
      %p98 = scmp.eq.s32.totalorder %s18, 1
      %p99 = scmp.ne.s32.totalorder %s94, %s96
      %p100 = scmp.eq.s32.totalorder %s18, 0
      %p101 = por %p99, %p100
      %p102 = scmp.ne.s32.totalorder %s94, %s96
      %p103 = scmp.eq.s32.totalorder %s23, 1
      %p104 = por %p102, %p103
      %p105 = scmp.ne.s32.totalorder %s96, %s97
      %p106 = scmp.eq.s32.totalorder %s23, 0
      %p107 = por %p105, %p106
      %p108 = scmp.ne.s32.totalorder %s96, %s97
      %p109 = scmp.eq.s32.totalorder %s24, 1
      %p110 = por %p108, %p109
      %p112 = scmp.ne.s32.totalorder %s97, %s111
      %p113 = scmp.eq.s32.totalorder %s24, 0
      %p114 = por %p112, %p113
      %s115 = ssub.s32 %s18, %s25
      %p116 = scmp.eq.s32.totalorder %s115, 0
      %s118 = sadd.s32 %s117, 1
      %s119 = scalar_select %p116, %s117, %s118
      %p122 = pneg %p116
      %p123 = scmp.eq.s32.totalorder %s18, 1
      %p124 = por %p122, %p123
      %p125 = scmp.ne.s32.totalorder %s117, %s120
      %p126 = scmp.eq.s32.totalorder %s18, 0
      %p127 = por %p125, %p126
      %p128 = scmp.ne.s32.totalorder %s117, %s120
      %p129 = scmp.eq.s32.totalorder %s23, 1
      %p130 = por %p128, %p129
      %p131 = scmp.ne.s32.totalorder %s120, %s121
      %p132 = scmp.eq.s32.totalorder %s23, 0
      %p133 = por %p131, %p132
      %p134 = scmp.ne.s32.totalorder %s120, %s121
      %p135 = scmp.eq.s32.totalorder %s24, 1
      %p136 = por %p134, %p135
      %p138 = scmp.ne.s32.totalorder %s121, %s137
      %p139 = scmp.eq.s32.totalorder %s24, 0
      %p140 = por %p138, %p139
      %p141 = scmp.le.s32.totalorder 1, %s18
      %p142 = scmp.lt.s32.totalorder %s18, 3
      %p143 = pnand %p141, %p142
      %p144 = pneg %p143
      // Predicated region
      $region9: #{tpu_custom_call.1} parent=5 // pred_check
        _
      $region10: #{tpu_custom_call.1} parent=5 // pred_check_branch
        %146 = sbr.rel (%p143) target = $region12
      $region11: #{tpu_custom_call.1} parent=5 // pred_region
        %s147 = ssub.s32 %s18, 1
        // Predicated region
        $region13: #{tpu_custom_call.1} parent=11 // pred_check
          %p148 = pneg %p65
        $region14: #{tpu_custom_call.1} parent=11 // pred_check_branch
          %150 = sbr.rel (%p148) target = $region16
        $region15: #{tpu_custom_call.1} parent=11 // pred_region
          %s152 = ssub.s32 10240, 10240
          %153 = vsyncadd [#allocation6], %s152
          %s154 = sshll.u32 [#allocation5], 4
          %s155 = int_to_ptr.vmem [resolvable:$true] %s154
          %160 = dma.hbm_to_vmem [thread:$0]  %s1, 10240, %s155, [#allocation6], 128, 128, 8
        $region16: #{tpu_custom_call.1} parent=11 // pred_fallthru
          _
        // Predicated region
        $region17: #{tpu_custom_call.1} parent=11 // pred_check
          %p161 = pneg %p86
        $region18: #{tpu_custom_call.1} parent=11 // pred_check_branch
          %163 = sbr.rel (%p161) target = $region20
        $region19: #{tpu_custom_call.1} parent=11 // pred_region
          %s165 = ssub.s32 128, 128
          %166 = vsyncadd [#allocation6], %s165
          %s168 = sshll.u32 [#allocation7], 4
          %s169 = int_to_ptr.vmem [resolvable:$true] %s168
          %171 = dma.hbm_to_vmem [thread:$0]  %s2, 128, %s169, [#allocation6]
        $region20: #{tpu_custom_call.1} parent=11 // pred_fallthru
          _
        // Predicated region
        $region21: #{tpu_custom_call.1} parent=11 // pred_check
          %p172 = pneg %p107
        $region22: #{tpu_custom_call.1} parent=11 // pred_check_branch
          %174 = sbr.rel (%p172) target = $region24
        $region23: #{tpu_custom_call.1} parent=11 // pred_region
          %s176 = ssub.s32 2048, 2048
          %177 = vsyncadd [#allocation9], %s176
          %s178 = sshll.u32 [#allocation8], 4
          %s179 = int_to_ptr.vmem [resolvable:$true] %s178
          %184 = dma.hbm_to_vmem [thread:$0]  %s3, 2048, %s179, [#allocation9], 128, 128, 8
        $region24: #{tpu_custom_call.1} parent=11 // pred_fallthru
          _
      $region12: #{tpu_custom_call.1} parent=5 // pred_fallthru
        _
      %p185 = scmp.lt.s32.totalorder %s18, 2
      // Predicated region
      $region25: #{tpu_custom_call.1} parent=5 // pred_check
        %p186 = pneg %p185
      $region26: #{tpu_custom_call.1} parent=5 // pred_check_branch
        %188 = sbr.rel (%p186) target = $region28
      $region27: #{tpu_custom_call.1} parent=5 // pred_region
        // Predicated region
        $region29: #{tpu_custom_call.1} parent=27 // pred_check
          %p189 = pneg %p38
        $region30: #{tpu_custom_call.1} parent=27 // pred_check_branch
          %191 = sbr.rel (%p189) target = $region32
        $region31: #{tpu_custom_call.1} parent=27 // pred_region
          %s192 = sand.u32 %s28, 1
          %s193 = scalar_lea.sflag [#allocation3], %s192
          %s194 = sand.u32 %s28, 1
          %s195 = smul.addr %s194, 192
          %s196 = scalar_lea.vmem [#allocation2], %s195
          %s197 = smul.u32 8, %s18
          %s199 = ssub.s32 3072, 3072
          %200 = vsyncadd %s193, %s199
          %s201 = smul.addr %s197, 3
          %s202 = smul.addr %s201, 128
          %s203 = scalar_lea.hbm %s0, %s202
          %s204 = sshll.u32 %s196, 4
          %s205 = int_to_ptr.vmem [resolvable:$true] %s204
          %210 = dma.hbm_to_vmem [thread:$0]  %s203, 3072, %s205, %s193, 128, 128, 8
        $region32: #{tpu_custom_call.1} parent=27 // pred_fallthru
          _
      $region28: #{tpu_custom_call.1} parent=5 // pred_fallthru
        _
      %p211 = scmp.le.s32.totalorder 1, %s18
      %p212 = scmp.lt.s32.totalorder %s18, 3
      %p213 = pnand %p211, %p212
      %p214 = pneg %p213
      // Predicated region
      $region33: #{tpu_custom_call.1} parent=5 // pred_check
        _
      $region34: #{tpu_custom_call.1} parent=5 // pred_check_branch
        %216 = sbr.rel (%p213) target = $region36
      $region35: #{tpu_custom_call.1} parent=5 // pred_region
        %s217 = ssub.s32 %s18, 1
        %s218 = sand.u32 %s31, 1
        %s219 = scalar_lea.sflag [#allocation3], %s218
        %s220 = sand.u32 %s31, 1
        %s221 = smul.addr %s220, 192
        %s222 = scalar_lea.vmem [#allocation2], %s221
        // Predicated region
        $region37: #{tpu_custom_call.1} parent=35 // pred_check
          %p223 = pneg %p44
        $region38: #{tpu_custom_call.1} parent=35 // pred_check_branch
          %225 = sbr.rel (%p223) target = $region40
        $region39: #{tpu_custom_call.1} parent=35 // pred_region
          %226 = dma.done %s219, 3072
        $region40: #{tpu_custom_call.1} parent=35 // pred_fallthru
          _
        // Predicated region
        $region41: #{tpu_custom_call.1} parent=35 // pred_check
          %p227 = pneg %p65
        $region42: #{tpu_custom_call.1} parent=35 // pred_check_branch
          %229 = sbr.rel (%p227) target = $region44
        $region43: #{tpu_custom_call.1} parent=35 // pred_region
          %230 = dma.done [#allocation6], 10240
        $region44: #{tpu_custom_call.1} parent=35 // pred_fallthru
          _
        // Predicated region
        $region45: #{tpu_custom_call.1} parent=35 // pred_check
          %p231 = pneg %p86
        $region46: #{tpu_custom_call.1} parent=35 // pred_check_branch
          %233 = sbr.rel (%p231) target = $region48
        $region47: #{tpu_custom_call.1} parent=35 // pred_region
          %234 = dma.done [#allocation6], 128
        $region48: #{tpu_custom_call.1} parent=35 // pred_fallthru
          _
        // Predicated region
        $region49: #{tpu_custom_call.1} parent=35 // pred_check
          %p235 = pneg %p107
        $region50: #{tpu_custom_call.1} parent=35 // pred_check_branch
          %237 = sbr.rel (%p235) target = $region52
        $region51: #{tpu_custom_call.1} parent=35 // pred_region
          %238 = dma.done [#allocation9], 2048
        $region52: #{tpu_custom_call.1} parent=35 // pred_fallthru
          _
        %s239 = sand.u32 %s31, 1
        %s240 = scalar_lea.sflag [#allocation3], %s239
        %s241 = sand.u32 %s31, 1
        %s242 = smul.addr %s241, 192
        %s243 = scalar_lea.vmem [#allocation2], %s242
        %p244 = pneg %p44
        %p245 = pneg %p41
        %p246 = pneg %p65
        %p247 = pneg %p62
        %p248 = pneg %p86
        %p249 = pneg %p83
        %p250 = pneg %p107
        %p251 = pneg %p104
        %p252 = pneg %p133
        %p253 = pneg %p130
        %s254 = sand.u32 %s120, 1
        %s255 = scalar_lea.sflag [#allocation4], %s254
        %s256 = sand.u32 %s120, 1
        %s257 = smul.addr %s256, 8
        %s258 = scalar_lea.vmem [#allocation10], %s257
        %s259 = smul.u32 8, %s23
        %v260 = vld [vmem:[%s222] sm:$0xff]
        %v261 = vld [vmem:[%s222 + $0x8] sm:$0xff]
        %v262 = vld [vmem:[%s222 + $0x10] sm:$0xff]
        %v263 = vld [vmem:[%s222 + $0x18] sm:$0xff]
        %v264 = vld [vmem:[%s222 + $0x20] sm:$0xff]
        %v265 = vld [vmem:[%s222 + $0x28] sm:$0xff]
        %v266 = vld [vmem:[%s222 + $0x30] sm:$0xff]
        %v267 = vld [vmem:[%s222 + $0x38] sm:$0xff]
        %v268 = vld [vmem:[%s222 + $0x40] sm:$0xff]
        %v269 = vld [vmem:[%s222 + $0x48] sm:$0xff]
        %v270 = vld [vmem:[%s222 + $0x50] sm:$0xff]
        %v271 = vld [vmem:[%s222 + $0x58] sm:$0xff]
        %v272 = vld [vmem:[%s222 + $0x60] sm:$0xff]
        %v273 = vld [vmem:[%s222 + $0x68] sm:$0xff]
        %v274 = vld [vmem:[%s222 + $0x70] sm:$0xff]
        %v275 = vld [vmem:[%s222 + $0x78] sm:$0xff]
        %v276 = vld [vmem:[%s222 + $0x80] sm:$0xff]
        %v277 = vld [vmem:[%s222 + $0x88] sm:$0xff]
        %v278 = vld [vmem:[%s222 + $0x90] sm:$0xff]
        %v279 = vld [vmem:[%s222 + $0x98] sm:$0xff]
        %v280 = vld [vmem:[%s222 + $0xa0] sm:$0xff]
        %v281 = vld [vmem:[%s222 + $0xa8] sm:$0xff]
        %v282 = vld [vmem:[%s222 + $0xb0] sm:$0xff]
        %v283 = vld [vmem:[%s222 + $0xb8] sm:$0xff]
        %vm284 = vcmask 408576
        %v285 = vsel %vm284, %v260, 0.0
        %v286 = vsel %vm284, %v261, 0.0
        %v287 = vsel %vm284, %v262, 0.0
        %v288 = vsel %vm284, %v263, 0.0
        %v289 = vsel %vm284, %v264, 0.0
        %v290 = vsel %vm284, %v265, 0.0
        %v291 = vsel %vm284, %v266, 0.0
        %v292 = vsel %vm284, %v267, 0.0
        %v293 = vsel %vm284, %v268, 0.0
        %v294 = vsel %vm284, %v269, 0.0
        %v295 = vsel %vm284, %v270, 0.0
        %v296 = vsel %vm284, %v271, 0.0
        %v297 = vsel %vm284, %v272, 0.0
        %v298 = vsel %vm284, %v273, 0.0
        %v299 = vsel %vm284, %v274, 0.0
        %v300 = vsel %vm284, %v275, 0.0
        %v301 = vsel %vm284, %v276, 0.0
        %v302 = vsel %vm284, %v277, 0.0
        %v303 = vsel %vm284, %v278, 0.0
        %v304 = vsel %vm284, %v279, 0.0
        %v305 = vsel %vm284, %v280, 0.0
        %v306 = vsel %vm284, %v281, 0.0
        %v307 = vsel %vm284, %v282, 0.0
        %v308 = vsel %vm284, %v283, 0.0
        %v309 = vld [vmem:[#allocation5] sm:$0xff]
        %v310 = vld [vmem:[#allocation5 + $0x8] sm:$0xff]
        %v311 = vld [vmem:[#allocation5 + $0x10] sm:$0xff]
        %v312 = vld [vmem:[#allocation5 + $0x18] sm:$0xff]
        %v313 = vld [vmem:[#allocation5 + $0x20] sm:$0xff]
        %v314 = vld [vmem:[#allocation5 + $0x28] sm:$0xff]
        %v315 = vld [vmem:[#allocation5 + $0x30] sm:$0xff]
        %v316 = vld [vmem:[#allocation5 + $0x38] sm:$0xff]
        %v317 = vld [vmem:[#allocation5 + $0x40] sm:$0xff]
        %v318 = vld [vmem:[#allocation5 + $0x48] sm:$0xff]
        %v319 = vld [vmem:[#allocation5 + $0x50] sm:$0xff]
        %v320 = vld [vmem:[#allocation5 + $0x58] sm:$0xff]
        %v321 = vld [vmem:[#allocation5 + $0x60] sm:$0xff]
        %v322 = vld [vmem:[#allocation5 + $0x68] sm:$0xff]
        %v323 = vld [vmem:[#allocation5 + $0x70] sm:$0xff]
        %v324 = vld [vmem:[#allocation5 + $0x78] sm:$0xff]
        %v325 = vld [vmem:[#allocation5 + $0x80] sm:$0xff]
        %v326 = vld [vmem:[#allocation5 + $0x88] sm:$0xff]
        %v327 = vld [vmem:[#allocation5 + $0x90] sm:$0xff]
        %v328 = vld [vmem:[#allocation5 + $0x98] sm:$0xff]
        %v329 = vld [vmem:[#allocation5 + $0xa0] sm:$0xff]
        %v330 = vld [vmem:[#allocation5 + $0xa8] sm:$0xff]
        %v331 = vld [vmem:[#allocation5 + $0xb0] sm:$0xff]
        %v332 = vld [vmem:[#allocation5 + $0xb8] sm:$0xff]
        %v333 = vld [vmem:[#allocation5 + $0xc0] sm:$0xff]
        %v334 = vld [vmem:[#allocation5 + $0xc8] sm:$0xff]
        %v335 = vld [vmem:[#allocation5 + $0xd0] sm:$0xff]
        %v336 = vld [vmem:[#allocation5 + $0xd8] sm:$0xff]
        %v337 = vld [vmem:[#allocation5 + $0xe0] sm:$0xff]
        %v338 = vld [vmem:[#allocation5 + $0xe8] sm:$0xff]
        %v339 = vld [vmem:[#allocation5 + $0xf0] sm:$0xff]
        %v340 = vld [vmem:[#allocation5 + $0xf8] sm:$0xff]
        %v341 = vld [vmem:[#allocation5 + $0x100] sm:$0xff]
        %v342 = vld [vmem:[#allocation5 + $0x108] sm:$0xff]
        %v343 = vld [vmem:[#allocation5 + $0x110] sm:$0xff]
        %v344 = vld [vmem:[#allocation5 + $0x118] sm:$0xff]
        %v345 = vld [vmem:[#allocation5 + $0x120] sm:$0xff]
        %v346 = vld [vmem:[#allocation5 + $0x128] sm:$0xff]
        %v347 = vld [vmem:[#allocation5 + $0x130] sm:$0xff]
        %v348 = vld [vmem:[#allocation5 + $0x138] sm:$0xff]
        %v349 = vld [vmem:[#allocation5 + $0x140] sm:$0xff]
        %v350 = vld [vmem:[#allocation5 + $0x148] sm:$0xff]
        %v351 = vld [vmem:[#allocation5 + $0x150] sm:$0xff]
        %v352 = vld [vmem:[#allocation5 + $0x158] sm:$0xff]
        %v353 = vld [vmem:[#allocation5 + $0x160] sm:$0xff]
        %v354 = vld [vmem:[#allocation5 + $0x168] sm:$0xff]
        %v355 = vld [vmem:[#allocation5 + $0x170] sm:$0xff]
        %v356 = vld [vmem:[#allocation5 + $0x178] sm:$0xff]
        %v357 = vld [vmem:[#allocation5 + $0x180] sm:$0xff]
        %v358 = vld [vmem:[#allocation5 + $0x188] sm:$0xff]
        %v359 = vld [vmem:[#allocation5 + $0x190] sm:$0xff]
        %v360 = vld [vmem:[#allocation5 + $0x198] sm:$0xff]
        %v361 = vld [vmem:[#allocation5 + $0x1a0] sm:$0xff]
        %v362 = vld [vmem:[#allocation5 + $0x1a8] sm:$0xff]
        %v363 = vld [vmem:[#allocation5 + $0x1b0] sm:$0xff]
        %v364 = vld [vmem:[#allocation5 + $0x1b8] sm:$0xff]
        %v365 = vld [vmem:[#allocation5 + $0x1c0] sm:$0xff]
        %v366 = vld [vmem:[#allocation5 + $0x1c8] sm:$0xff]
        %v367 = vld [vmem:[#allocation5 + $0x1d0] sm:$0xff]
        %v368 = vld [vmem:[#allocation5 + $0x1d8] sm:$0xff]
        %v369 = vld [vmem:[#allocation5 + $0x1e0] sm:$0xff]
        %v370 = vld [vmem:[#allocation5 + $0x1e8] sm:$0xff]
        %v371 = vld [vmem:[#allocation5 + $0x1f0] sm:$0xff]
        %v372 = vld [vmem:[#allocation5 + $0x1f8] sm:$0xff]
        %v373 = vld [vmem:[#allocation5 + $0x200] sm:$0xff]
        %v374 = vld [vmem:[#allocation5 + $0x208] sm:$0xff]
        %v375 = vld [vmem:[#allocation5 + $0x210] sm:$0xff]
        %v376 = vld [vmem:[#allocation5 + $0x218] sm:$0xff]
        %v377 = vld [vmem:[#allocation5 + $0x220] sm:$0xff]
        %v378 = vld [vmem:[#allocation5 + $0x228] sm:$0xff]
        %v379 = vld [vmem:[#allocation5 + $0x230] sm:$0xff]
        %v380 = vld [vmem:[#allocation5 + $0x238] sm:$0xff]
        %v381 = vld [vmem:[#allocation5 + $0x240] sm:$0xff]
        %v382 = vld [vmem:[#allocation5 + $0x248] sm:$0xff]
        %v383 = vld [vmem:[#allocation5 + $0x250] sm:$0xff]
        %v384 = vld [vmem:[#allocation5 + $0x258] sm:$0xff]
        %v385 = vld [vmem:[#allocation5 + $0x260] sm:$0xff]
        %v386 = vld [vmem:[#allocation5 + $0x268] sm:$0xff]
        %v387 = vld [vmem:[#allocation5 + $0x270] sm:$0xff]
        %v388 = vld [vmem:[#allocation5 + $0x278] sm:$0xff]
        %v389 = vld [vmem:[#allocation7] sm:$0xff]
        %v390 = vld [vmem:[#allocation8] sm:$0xff]
        %v391 = vld [vmem:[#allocation8 + $0x8] sm:$0xff]
        %v392 = vld [vmem:[#allocation8 + $0x10] sm:$0xff]
        %v393 = vld [vmem:[#allocation8 + $0x18] sm:$0xff]
        %v394 = vld [vmem:[#allocation8 + $0x20] sm:$0xff]
        %v395 = vld [vmem:[#allocation8 + $0x28] sm:$0xff]
        %v396 = vld [vmem:[#allocation8 + $0x30] sm:$0xff]
        %v397 = vld [vmem:[#allocation8 + $0x38] sm:$0xff]
        %v398 = vld [vmem:[#allocation8 + $0x40] sm:$0xff]
        %v399 = vld [vmem:[#allocation8 + $0x48] sm:$0xff]
        %v400 = vld [vmem:[#allocation8 + $0x50] sm:$0xff]
        %v401 = vld [vmem:[#allocation8 + $0x58] sm:$0xff]
        %v402 = vld [vmem:[#allocation8 + $0x60] sm:$0xff]
        %v403 = vld [vmem:[#allocation8 + $0x68] sm:$0xff]
        %v404 = vld [vmem:[#allocation8 + $0x70] sm:$0xff]
        %v405 = vld [vmem:[#allocation8 + $0x78] sm:$0xff]
        %v430 = vcombine.high %v285, %v285
        %v431 = vcombine.high %v286, %v286
        %v432 = vcombine.high %v288, %v288
        %v433 = vcombine.high %v289, %v289
        %v434 = vcombine.high %v291, %v291
        %v435 = vcombine.high %v292, %v292
        %v436 = vcombine.high %v294, %v294
        %v437 = vcombine.high %v295, %v295
        %v438 = vcombine.high %v297, %v297
        %v439 = vcombine.high %v298, %v298
        %v440 = vcombine.high %v300, %v300
        %v441 = vcombine.high %v301, %v301
        %v442 = vcombine.high %v303, %v303
        %v443 = vcombine.high %v304, %v304
        %v444 = vcombine.high %v306, %v306
        %v445 = vcombine.high %v307, %v307
        %v446 = vcombine.high %v287, %v287
        %v447 = vcombine.high %v290, %v290
        %v448 = vcombine.high %v293, %v293
        %v449 = vcombine.high %v296, %v296
        %v450 = vcombine.high %v299, %v299
        %v451 = vcombine.high %v302, %v302
        %v452 = vcombine.high %v305, %v305
        %v453 = vcombine.high %v308, %v308
        %vm454 = vcmask 1042432
        %vm455 = vcmask 1046532
        %vm456 = vmor %vm454, %vm455
        %v457 = vrot.slane %v285, 5
        %v458 = vrot.slane %v457, 4
        %v459 = vrot.slane %v430, 5
        %v460 = vsel %vm456, %v458, %v459
        %v461 = vrot.slane %v459, 4
        %v462 = vrot.slane %v286, 5
        %v463 = vsel %vm456, %v461, %v462
        %v464 = vrot.slane %v462, 4
        %v465 = vrot.slane %v431, 5
        %v466 = vsel %vm456, %v464, %v465
        %v467 = vrot.slane %v465, 4
        %v468 = vrot.slane %v287, 5
        %v469 = vsel %vm456, %v467, %v468
        %v470 = vrot.slane %v468, 4
        %v471 = vrot.slane %v446, 5
        %v472 = vsel %vm456, %v470, %v471
        %v473 = vrot.slane %v288, 5
        %v474 = vrot.slane %v473, 4
        %v475 = vrot.slane %v432, 5
        %v476 = vsel %vm456, %v474, %v475
        %v477 = vrot.slane %v475, 4
        %v478 = vrot.slane %v289, 5
        %v479 = vsel %vm456, %v477, %v478
        %v480 = vrot.slane %v478, 4
        %v481 = vrot.slane %v433, 5
        %v482 = vsel %vm456, %v480, %v481
        %v483 = vrot.slane %v481, 4
        %v484 = vrot.slane %v290, 5
        %v485 = vsel %vm456, %v483, %v484
        %v486 = vrot.slane %v484, 4
        %v487 = vrot.slane %v447, 5
        %v488 = vsel %vm456, %v486, %v487
        %v489 = vrot.slane %v291, 5
        %v490 = vrot.slane %v489, 4
        %v491 = vrot.slane %v434, 5
        %v492 = vsel %vm456, %v490, %v491
        %v493 = vrot.slane %v491, 4
        %v494 = vrot.slane %v292, 5
        %v495 = vsel %vm456, %v493, %v494
        %v496 = vrot.slane %v494, 4
        %v497 = vrot.slane %v435, 5
        %v498 = vsel %vm456, %v496, %v497
        %v499 = vrot.slane %v497, 4
        %v500 = vrot.slane %v293, 5
        %v501 = vsel %vm456, %v499, %v500
        %v502 = vrot.slane %v500, 4
        %v503 = vrot.slane %v448, 5
        %v504 = vsel %vm456, %v502, %v503
        %v505 = vrot.slane %v294, 5
        %v506 = vrot.slane %v505, 4
        %v507 = vrot.slane %v436, 5
        %v508 = vsel %vm456, %v506, %v507
        %v509 = vrot.slane %v507, 4
        %v510 = vrot.slane %v295, 5
        %v511 = vsel %vm456, %v509, %v510
        %v512 = vrot.slane %v510, 4
        %v513 = vrot.slane %v437, 5
        %v514 = vsel %vm456, %v512, %v513
        %v515 = vrot.slane %v513, 4
        %v516 = vrot.slane %v296, 5
        %v517 = vsel %vm456, %v515, %v516
        %v518 = vrot.slane %v516, 4
        %v519 = vrot.slane %v449, 5
        %v520 = vsel %vm456, %v518, %v519
        %v521 = vrot.slane %v297, 5
        %v522 = vrot.slane %v521, 4
        %v523 = vrot.slane %v438, 5
        %v524 = vsel %vm456, %v522, %v523
        %v525 = vrot.slane %v523, 4
        %v526 = vrot.slane %v298, 5
        %v527 = vsel %vm456, %v525, %v526
        %v528 = vrot.slane %v526, 4
        %v529 = vrot.slane %v439, 5
        %v530 = vsel %vm456, %v528, %v529
        %v531 = vrot.slane %v529, 4
        %v532 = vrot.slane %v299, 5
        %v533 = vsel %vm456, %v531, %v532
        %v534 = vrot.slane %v532, 4
        %v535 = vrot.slane %v450, 5
        %v536 = vsel %vm456, %v534, %v535
        %v537 = vrot.slane %v300, 5
        %v538 = vrot.slane %v537, 4
        %v539 = vrot.slane %v440, 5
        %v540 = vsel %vm456, %v538, %v539
        %v541 = vrot.slane %v539, 4
        %v542 = vrot.slane %v301, 5
        %v543 = vsel %vm456, %v541, %v542
        %v544 = vrot.slane %v542, 4
        %v545 = vrot.slane %v441, 5
        %v546 = vsel %vm456, %v544, %v545
        %v547 = vrot.slane %v545, 4
        %v548 = vrot.slane %v302, 5
        %v549 = vsel %vm456, %v547, %v548
        %v550 = vrot.slane %v548, 4
        %v551 = vrot.slane %v451, 5
        %v552 = vsel %vm456, %v550, %v551
        %v553 = vrot.slane %v303, 5
        %v554 = vrot.slane %v553, 4
        %v555 = vrot.slane %v442, 5
        %v556 = vsel %vm456, %v554, %v555
        %v557 = vrot.slane %v555, 4
        %v558 = vrot.slane %v304, 5
        %v559 = vsel %vm456, %v557, %v558
        %v560 = vrot.slane %v558, 4
        %v561 = vrot.slane %v443, 5
        %v562 = vsel %vm456, %v560, %v561
        %v563 = vrot.slane %v561, 4
        %v564 = vrot.slane %v305, 5
        %v565 = vsel %vm456, %v563, %v564
        %v566 = vrot.slane %v564, 4
        %v567 = vrot.slane %v452, 5
        %v568 = vsel %vm456, %v566, %v567
        %v569 = vrot.slane %v306, 5
        %v570 = vrot.slane %v569, 4
        %v571 = vrot.slane %v444, 5
        %v572 = vsel %vm456, %v570, %v571
        %v573 = vrot.slane %v571, 4
        %v574 = vrot.slane %v307, 5
        %v575 = vsel %vm456, %v573, %v574
        %v576 = vrot.slane %v574, 4
        %v577 = vrot.slane %v445, 5
        %v578 = vsel %vm456, %v576, %v577
        %v579 = vrot.slane %v577, 4
        %v580 = vrot.slane %v308, 5
        %v581 = vsel %vm456, %v579, %v580
        %v582 = vrot.slane %v580, 4
        %v583 = vrot.slane %v453, 5
        %v584 = vsel %vm456, %v582, %v583
        %v585 = vcombine.low %v460, %v463
        %v586 = vcombine.low %v466, %v469
        %v587 = vcombine.low %v472, %v476
        %v588 = vcombine.low %v479, %v482
        %v589 = vcombine.low %v485, %v488
        %v590 = vcombine.low %v492, %v495
        %v591 = vcombine.low %v498, %v501
        %v592 = vcombine.low %v504, %v508
        %v593 = vcombine.low %v511, %v514
        %v594 = vcombine.low %v517, %v520
        %v595 = vcombine.low %v524, %v527
        %v596 = vcombine.low %v530, %v533
        %v597 = vcombine.low %v536, %v540
        %v598 = vcombine.low %v543, %v546
        %v599 = vcombine.low %v549, %v552
        %v600 = vcombine.low %v556, %v559
        %v601 = vcombine.low %v562, %v565
        %v602 = vcombine.low %v568, %v572
        %v603 = vcombine.low %v575, %v578
        %v604 = vcombine.low %v581, %v584
        %625 = vmatprep.subr.mxu0 0.0
        %626 = vmatpush1.msra.mxu0 %v340
        %627 = vmatprep.subr.mxu0 0.0
        %628 = vmatpush1.msra.mxu0 %v339
        %629 = vmatprep.subr.mxu0 0.0
        %630 = vmatpush1.msra.mxu0 %v338
        %631 = vmatprep.subr.mxu0 0.0
        %632 = vmatpush1.msra.mxu0 %v337
        %633 = vmatprep.subr.mxu0 0.0
        %634 = vmatpush1.msra.mxu0 %v336
        %635 = vmatprep.subr.mxu0 0.0
        %636 = vmatpush1.msra.mxu0 %v335
        %637 = vmatprep.subr.mxu0 0.0
        %638 = vmatpush1.msra.mxu0 %v334
        %639 = vmatprep.subr.mxu0 0.0
        %640 = vmatpush1.msra.mxu0 %v333
        %641 = vmatprep.subr.mxu0 0.0
        %642 = vmatpush1.msra.mxu0 %v332
        %643 = vmatprep.subr.mxu0 0.0
        %644 = vmatpush1.msra.mxu0 %v331
        %645 = vmatprep.subr.mxu0 0.0
        %646 = vmatpush1.msra.mxu0 %v330
        %647 = vmatprep.subr.mxu0 0.0
        %648 = vmatpush1.msra.mxu0 %v329
        %649 = vmatprep.subr.mxu0 0.0
        %650 = vmatpush1.msra.mxu0 %v328
        %651 = vmatprep.subr.mxu0 0.0
        %652 = vmatpush1.msra.mxu0 %v327
        %653 = vmatprep.subr.mxu0 0.0
        %654 = vmatpush1.msra.mxu0 %v326
        %655 = vmatprep.subr.mxu0 0.0
        %656 = vmatpush1.msra.mxu0 %v325
        %657 = vmatprep.subr.mxu0 0.0
        %658 = vmatpush2.msra.mxu0 0.0
        %659 = vmatprep.subr.mxu0 0.0
        %660 = vmatpush2.msra.mxu0 0.0
        %661 = vmatprep.subr.mxu0 0.0
        %662 = vmatpush2.msra.mxu0 0.0
        %663 = vmatprep.subr.mxu0 0.0
        %664 = vmatpush2.msra.mxu0 0.0
        %665 = vmatprep.subr.mxu0 0.0
        %666 = vmatpush2.msra.mxu0 0.0
        %667 = vmatprep.subr.mxu0 0.0
        %668 = vmatpush2.msra.mxu0 0.0
        %669 = vmatprep.subr.mxu0 0.0
        %670 = vmatpush2.msra.mxu0 0.0
        %671 = vmatprep.subr.mxu0 0.0
        %672 = vmatpush2.msra.mxu0 0.0
        %673 = vmatprep.subr.mxu0 0.0
        %674 = vmatpush2.msra.mxu0 0.0
        %675 = vmatprep.subr.mxu0 0.0
        %676 = vmatpush2.msra.mxu0 0.0
        %677 = vmatprep.subr.mxu0 0.0
        %678 = vmatpush2.msra.mxu0 0.0
        %679 = vmatprep.subr.mxu0 0.0
        %680 = vmatpush2.msra.mxu0 0.0
        %681 = vmatprep.subr.mxu0 0.0
        %682 = vmatpush2.msra.mxu0 0.0
        %683 = vmatprep.subr.mxu0 0.0
        %684 = vmatpush2.msra.mxu0 0.0
        %685 = vmatprep.subr.mxu0 0.0
        %686 = vmatpush2.msra.mxu0 0.0
        %687 = vmatprep.subr.mxu0 0.0
        %688 = vmatpush2.msra.mxu0 0.0
        %689 = vmatprep.mubr.f32.mxu0 0.0
        %690 = vmatmul.mubr.f32.gmra.mxu0 %v585
        %v691 = vpop.f32.mrf.mxu0
        %v692 = vadd.f32 0.0, %v691
        %v693 = vpop.f32.mrf.mxu0
        %694 = vmatprep.mubr.f32.mxu0 0.0
        %695 = vmatmul.mubr.f32.gmra.mxu0 %v586
        %v696 = vpop.f32.mrf.mxu0
        %v697 = vadd.f32 0.0, %v696
        %v698 = vpop.f32.mrf.mxu0
        %699 = vmatprep.mubr.f32.mxu0 0.0
        %700 = vmatmul.mubr.f32.gmra.mxu0 %v587
        %v701 = vpop.f32.mrf.mxu0
        %v702 = vadd.f32 0.0, %v701
        %v703 = vpop.f32.mrf.mxu0
        %704 = vmatprep.mubr.f32.mxu0 0.0
        %705 = vmatmul.mubr.f32.gmra.mxu0 %v588
        %v706 = vpop.f32.mrf.mxu0
        %v707 = vadd.f32 0.0, %v706
        %v708 = vpop.f32.mrf.mxu0
        %709 = vmatprep.mubr.f32.mxu0 0.0
        %710 = vmatmul.mubr.f32.gmra.mxu0 %v589
        %v711 = vpop.f32.mrf.mxu0
        %v712 = vadd.f32 0.0, %v711
        %v713 = vpop.f32.mrf.mxu0
        %714 = vmatprep.mubr.f32.mxu0 0.0
        %715 = vmatmul.mubr.f32.gmra.mxu0 %v590
        %v716 = vpop.f32.mrf.mxu0
        %v717 = vadd.f32 0.0, %v716
        %v718 = vpop.f32.mrf.mxu0
        %719 = vmatprep.mubr.f32.mxu0 0.0
        %720 = vmatmul.mubr.f32.gmra.mxu0 %v591
        %v721 = vpop.f32.mrf.mxu0
        %v722 = vadd.f32 0.0, %v721
        %v723 = vpop.f32.mrf.mxu0
        %724 = vmatprep.mubr.f32.mxu0 0.0
        %725 = vmatmul.mubr.f32.gmra.mxu0 %v592
        %v726 = vpop.f32.mrf.mxu0
        %v727 = vadd.f32 0.0, %v726
        %v728 = vpop.f32.mrf.mxu0
        %729 = vmatprep.mubr.f32.mxu0 0.0
        %730 = vmatmul.mubr.f32.gmra.mxu0 %v593
        %v731 = vpop.f32.mrf.mxu0
        %v732 = vadd.f32 0.0, %v731
        %v733 = vpop.f32.mrf.mxu0
        %734 = vmatprep.mubr.f32.mxu0 0.0
        %735 = vmatmul.mubr.f32.gmra.mxu0 %v594
        %v736 = vpop.f32.mrf.mxu0
        %v737 = vadd.f32 0.0, %v736
        %v738 = vpop.f32.mrf.mxu0
        %739 = vmatprep.mubr.f32.mxu0 0.0
        %740 = vmatmul.mubr.f32.gmra.mxu0 %v595
        %v741 = vpop.f32.mrf.mxu0
        %v742 = vadd.f32 0.0, %v741
        %v743 = vpop.f32.mrf.mxu0
        %744 = vmatprep.mubr.f32.mxu0 0.0
        %745 = vmatmul.mubr.f32.gmra.mxu0 %v596
        %v746 = vpop.f32.mrf.mxu0
        %v747 = vadd.f32 0.0, %v746
        %v748 = vpop.f32.mrf.mxu0
        %749 = vmatprep.mubr.f32.mxu0 0.0
        %750 = vmatmul.mubr.f32.gmra.mxu0 %v597
        %v751 = vpop.f32.mrf.mxu0
        %v752 = vadd.f32 0.0, %v751
        %v753 = vpop.f32.mrf.mxu0
        %754 = vmatprep.mubr.f32.mxu0 0.0
        %755 = vmatmul.mubr.f32.gmra.mxu0 %v598
        %v756 = vpop.f32.mrf.mxu0
        %v757 = vadd.f32 0.0, %v756
        %v758 = vpop.f32.mrf.mxu0
        %759 = vmatprep.mubr.f32.mxu0 0.0
        %760 = vmatmul.mubr.f32.gmra.mxu0 %v599
        %v761 = vpop.f32.mrf.mxu0
        %v762 = vadd.f32 0.0, %v761
        %v763 = vpop.f32.mrf.mxu0
        %764 = vmatprep.mubr.f32.mxu0 0.0
        %765 = vmatmul.mubr.f32.gmra.mxu0 %v600
        %v766 = vpop.f32.mrf.mxu0
        %v767 = vadd.f32 0.0, %v766
        %v768 = vpop.f32.mrf.mxu0
        %769 = vmatprep.mubr.f32.mxu0 0.0
        %770 = vmatmul.mubr.f32.gmra.mxu0 %v601
        %v771 = vpop.f32.mrf.mxu0
        %v772 = vadd.f32 0.0, %v771
        %v773 = vpop.f32.mrf.mxu0
        %774 = vmatprep.mubr.f32.mxu0 0.0
        %775 = vmatmul.mubr.f32.gmra.mxu0 %v602
        %v776 = vpop.f32.mrf.mxu0
        %v777 = vadd.f32 0.0, %v776
        %v778 = vpop.f32.mrf.mxu0
        %779 = vmatprep.mubr.f32.mxu0 0.0
        %780 = vmatmul.mubr.f32.gmra.mxu0 %v603
        %v781 = vpop.f32.mrf.mxu0
        %v782 = vadd.f32 0.0, %v781
        %v783 = vpop.f32.mrf.mxu0
        %784 = vmatprep.mubr.f32.mxu0 0.0
        %785 = vmatmul.mubr.f32.gmra.mxu0 %v604
        %v786 = vpop.f32.mrf.mxu0
        %v787 = vadd.f32 0.0, %v786
        %v788 = vpop.f32.mrf.mxu0
        %789 = vdwg.mxu0
        %v790 = vcombine.low %v285, %v430
        %v791 = vcombine.low %v286, %v431
        %v792 = vcombine.low %v287, %v288
        %v793 = vcombine.low %v432, %v289
        %v794 = vcombine.low %v433, %v290
        %v795 = vcombine.low %v291, %v434
        %v796 = vcombine.low %v292, %v435
        %v797 = vcombine.low %v293, %v294
        %v798 = vcombine.low %v436, %v295
        %v799 = vcombine.low %v437, %v296
        %v800 = vcombine.low %v297, %v438
        %v801 = vcombine.low %v298, %v439
        %v802 = vcombine.low %v299, %v300
        %v803 = vcombine.low %v440, %v301
        %v804 = vcombine.low %v441, %v302
        %v805 = vcombine.low %v303, %v442
        %v806 = vcombine.low %v304, %v443
        %v807 = vcombine.low %v305, %v306
        %v808 = vcombine.low %v444, %v307
        %v809 = vcombine.low %v445, %v308
        %830 = vmatprep.subr.mxu0 0.0
        %831 = vmatpush1.msra.mxu0 %v324
        %832 = vmatprep.subr.mxu0 0.0
        %833 = vmatpush1.msra.mxu0 %v323
        %834 = vmatprep.subr.mxu0 0.0
        %835 = vmatpush1.msra.mxu0 %v322
        %836 = vmatprep.subr.mxu0 0.0
        %837 = vmatpush1.msra.mxu0 %v321
        %838 = vmatprep.subr.mxu0 0.0
        %839 = vmatpush1.msra.mxu0 %v320
        %840 = vmatprep.subr.mxu0 0.0
        %841 = vmatpush1.msra.mxu0 %v319
        %842 = vmatprep.subr.mxu0 0.0
        %843 = vmatpush1.msra.mxu0 %v318
        %844 = vmatprep.subr.mxu0 0.0
        %845 = vmatpush1.msra.mxu0 %v317
        %846 = vmatprep.subr.mxu0 0.0
        %847 = vmatpush1.msra.mxu0 %v316
        %848 = vmatprep.subr.mxu0 0.0
        %849 = vmatpush1.msra.mxu0 %v315
        %850 = vmatprep.subr.mxu0 0.0
        %851 = vmatpush1.msra.mxu0 %v314
        %852 = vmatprep.subr.mxu0 0.0
        %853 = vmatpush1.msra.mxu0 %v313
        %854 = vmatprep.subr.mxu0 0.0
        %855 = vmatpush1.msra.mxu0 %v312
        %856 = vmatprep.subr.mxu0 0.0
        %857 = vmatpush1.msra.mxu0 %v311
        %858 = vmatprep.subr.mxu0 0.0
        %859 = vmatpush1.msra.mxu0 %v310
        %860 = vmatprep.subr.mxu0 0.0
        %861 = vmatpush1.msra.mxu0 %v309
        %862 = vmatprep.subr.mxu0 0.0
        %863 = vmatpush2.msra.mxu0 0.0
        %864 = vmatprep.subr.mxu0 0.0
        %865 = vmatpush2.msra.mxu0 0.0
        %866 = vmatprep.subr.mxu0 0.0
        %867 = vmatpush2.msra.mxu0 0.0
        %868 = vmatprep.subr.mxu0 0.0
        %869 = vmatpush2.msra.mxu0 0.0
        %870 = vmatprep.subr.mxu0 0.0
        %871 = vmatpush2.msra.mxu0 0.0
        %872 = vmatprep.subr.mxu0 0.0
        %873 = vmatpush2.msra.mxu0 0.0
        %874 = vmatprep.subr.mxu0 0.0
        %875 = vmatpush2.msra.mxu0 0.0
        %876 = vmatprep.subr.mxu0 0.0
        %877 = vmatpush2.msra.mxu0 0.0
        %878 = vmatprep.subr.mxu0 0.0
        %879 = vmatpush2.msra.mxu0 0.0
        %880 = vmatprep.subr.mxu0 0.0
        %881 = vmatpush2.msra.mxu0 0.0
        %882 = vmatprep.subr.mxu0 0.0
        %883 = vmatpush2.msra.mxu0 0.0
        %884 = vmatprep.subr.mxu0 0.0
        %885 = vmatpush2.msra.mxu0 0.0
        %886 = vmatprep.subr.mxu0 0.0
        %887 = vmatpush2.msra.mxu0 0.0
        %888 = vmatprep.subr.mxu0 0.0
        %889 = vmatpush2.msra.mxu0 0.0
        %890 = vmatprep.subr.mxu0 0.0
        %891 = vmatpush2.msra.mxu0 0.0
        %892 = vmatprep.subr.mxu0 0.0
        %893 = vmatpush2.msra.mxu0 0.0
        %894 = vmatprep.mubr.f32.mxu0 0.0
        %895 = vmatmul.mubr.f32.gmra.mxu0 %v790
        %v896 = vpop.f32.mrf.mxu0
        %v897 = vadd.f32 %v692, %v896
        %v898 = vpop.f32.mrf.mxu0
        %899 = vmatprep.mubr.f32.mxu0 0.0
        %900 = vmatmul.mubr.f32.gmra.mxu0 %v791
        %v901 = vpop.f32.mrf.mxu0
        %v902 = vadd.f32 %v697, %v901
        %v903 = vpop.f32.mrf.mxu0
        %904 = vmatprep.mubr.f32.mxu0 0.0
        %905 = vmatmul.mubr.f32.gmra.mxu0 %v792
        %v906 = vpop.f32.mrf.mxu0
        %v907 = vadd.f32 %v702, %v906
        %v908 = vpop.f32.mrf.mxu0
        %909 = vmatprep.mubr.f32.mxu0 0.0
        %910 = vmatmul.mubr.f32.gmra.mxu0 %v793
        %v911 = vpop.f32.mrf.mxu0
        %v912 = vadd.f32 %v707, %v911
        %v913 = vpop.f32.mrf.mxu0
        %914 = vmatprep.mubr.f32.mxu0 0.0
        %915 = vmatmul.mubr.f32.gmra.mxu0 %v794
        %v916 = vpop.f32.mrf.mxu0
        %v917 = vadd.f32 %v712, %v916
        %v918 = vpop.f32.mrf.mxu0
        %919 = vmatprep.mubr.f32.mxu0 0.0
        %920 = vmatmul.mubr.f32.gmra.mxu0 %v795
        %v921 = vpop.f32.mrf.mxu0
        %v922 = vadd.f32 %v717, %v921
        %v923 = vpop.f32.mrf.mxu0
        %924 = vmatprep.mubr.f32.mxu0 0.0
        %925 = vmatmul.mubr.f32.gmra.mxu0 %v796
        %v926 = vpop.f32.mrf.mxu0
        %v927 = vadd.f32 %v722, %v926
        %v928 = vpop.f32.mrf.mxu0
        %929 = vmatprep.mubr.f32.mxu0 0.0
        %930 = vmatmul.mubr.f32.gmra.mxu0 %v797
        %v931 = vpop.f32.mrf.mxu0
        %v932 = vadd.f32 %v727, %v931
        %v933 = vpop.f32.mrf.mxu0
        %934 = vmatprep.mubr.f32.mxu0 0.0
        %935 = vmatmul.mubr.f32.gmra.mxu0 %v798
        %v936 = vpop.f32.mrf.mxu0
        %v937 = vadd.f32 %v732, %v936
        %v938 = vpop.f32.mrf.mxu0
        %939 = vmatprep.mubr.f32.mxu0 0.0
        %940 = vmatmul.mubr.f32.gmra.mxu0 %v799
        %v941 = vpop.f32.mrf.mxu0
        %v942 = vadd.f32 %v737, %v941
        %v943 = vpop.f32.mrf.mxu0
        %944 = vmatprep.mubr.f32.mxu0 0.0
        %945 = vmatmul.mubr.f32.gmra.mxu0 %v800
        %v946 = vpop.f32.mrf.mxu0
        %v947 = vadd.f32 %v742, %v946
        %v948 = vpop.f32.mrf.mxu0
        %949 = vmatprep.mubr.f32.mxu0 0.0
        %950 = vmatmul.mubr.f32.gmra.mxu0 %v801
        %v951 = vpop.f32.mrf.mxu0
        %v952 = vadd.f32 %v747, %v951
        %v953 = vpop.f32.mrf.mxu0
        %954 = vmatprep.mubr.f32.mxu0 0.0
        %955 = vmatmul.mubr.f32.gmra.mxu0 %v802
        %v956 = vpop.f32.mrf.mxu0
        %v957 = vadd.f32 %v752, %v956
        %v958 = vpop.f32.mrf.mxu0
        %959 = vmatprep.mubr.f32.mxu0 0.0
        %960 = vmatmul.mubr.f32.gmra.mxu0 %v803
        %v961 = vpop.f32.mrf.mxu0
        %v962 = vadd.f32 %v757, %v961
        %v963 = vpop.f32.mrf.mxu0
        %964 = vmatprep.mubr.f32.mxu0 0.0
        %965 = vmatmul.mubr.f32.gmra.mxu0 %v804
        %v966 = vpop.f32.mrf.mxu0
        %v967 = vadd.f32 %v762, %v966
        %v968 = vpop.f32.mrf.mxu0
        %969 = vmatprep.mubr.f32.mxu0 0.0
        %970 = vmatmul.mubr.f32.gmra.mxu0 %v805
        %v971 = vpop.f32.mrf.mxu0
        %v972 = vadd.f32 %v767, %v971
        %v973 = vpop.f32.mrf.mxu0
        %974 = vmatprep.mubr.f32.mxu0 0.0
        %975 = vmatmul.mubr.f32.gmra.mxu0 %v806
        %v976 = vpop.f32.mrf.mxu0
        %v977 = vadd.f32 %v772, %v976
        %v978 = vpop.f32.mrf.mxu0
        %979 = vmatprep.mubr.f32.mxu0 0.0
        %980 = vmatmul.mubr.f32.gmra.mxu0 %v807
        %v981 = vpop.f32.mrf.mxu0
        %v982 = vadd.f32 %v777, %v981
        %v983 = vpop.f32.mrf.mxu0
        %984 = vmatprep.mubr.f32.mxu0 0.0
        %985 = vmatmul.mubr.f32.gmra.mxu0 %v808
        %v986 = vpop.f32.mrf.mxu0
        %v987 = vadd.f32 %v782, %v986
        %v988 = vpop.f32.mrf.mxu0
        %989 = vmatprep.mubr.f32.mxu0 0.0
        %990 = vmatmul.mubr.f32.gmra.mxu0 %v809
        %v991 = vpop.f32.mrf.mxu0
        %v992 = vadd.f32 %v787, %v991
        %v993 = vpop.f32.mrf.mxu0
        %994 = vdwg.mxu0
        %vm995 = vcmask 1041408
        %vm996 = vcmask 1045508
        %vm997 = vmor %vm995, %vm996
        %v998 = vrot.slane %v285, 6
        %v999 = vrot.slane %v998, 4
        %v1000 = vrot.slane %v430, 6
        %v1001 = vsel %vm997, %v999, %v1000
        %v1002 = vrot.slane %v1000, 4
        %v1003 = vrot.slane %v286, 6
        %v1004 = vsel %vm997, %v1002, %v1003
        %v1005 = vrot.slane %v1003, 4
        %v1006 = vrot.slane %v431, 6
        %v1007 = vsel %vm997, %v1005, %v1006
        %v1008 = vrot.slane %v1006, 4
        %v1009 = vrot.slane %v287, 6
        %v1010 = vsel %vm997, %v1008, %v1009
        %v1011 = vrot.slane %v1009, 4
        %v1012 = vrot.slane %v446, 6
        %v1013 = vsel %vm997, %v1011, %v1012
        %v1014 = vrot.slane %v288, 6
        %v1015 = vrot.slane %v1014, 4
        %v1016 = vrot.slane %v432, 6
        %v1017 = vsel %vm997, %v1015, %v1016
        %v1018 = vrot.slane %v1016, 4
        %v1019 = vrot.slane %v289, 6
        %v1020 = vsel %vm997, %v1018, %v1019
        %v1021 = vrot.slane %v1019, 4
        %v1022 = vrot.slane %v433, 6
        %v1023 = vsel %vm997, %v1021, %v1022
        %v1024 = vrot.slane %v1022, 4
        %v1025 = vrot.slane %v290, 6
        %v1026 = vsel %vm997, %v1024, %v1025
        %v1027 = vrot.slane %v1025, 4
        %v1028 = vrot.slane %v447, 6
        %v1029 = vsel %vm997, %v1027, %v1028
        %v1030 = vrot.slane %v291, 6
        %v1031 = vrot.slane %v1030, 4
        %v1032 = vrot.slane %v434, 6
        %v1033 = vsel %vm997, %v1031, %v1032
        %v1034 = vrot.slane %v1032, 4
        %v1035 = vrot.slane %v292, 6
        %v1036 = vsel %vm997, %v1034, %v1035
        %v1037 = vrot.slane %v1035, 4
        %v1038 = vrot.slane %v435, 6
        %v1039 = vsel %vm997, %v1037, %v1038
        %v1040 = vrot.slane %v1038, 4
        %v1041 = vrot.slane %v293, 6
        %v1042 = vsel %vm997, %v1040, %v1041
        %v1043 = vrot.slane %v1041, 4
        %v1044 = vrot.slane %v448, 6
        %v1045 = vsel %vm997, %v1043, %v1044
        %v1046 = vrot.slane %v294, 6
        %v1047 = vrot.slane %v1046, 4
        %v1048 = vrot.slane %v436, 6
        %v1049 = vsel %vm997, %v1047, %v1048
        %v1050 = vrot.slane %v1048, 4
        %v1051 = vrot.slane %v295, 6
        %v1052 = vsel %vm997, %v1050, %v1051
        %v1053 = vrot.slane %v1051, 4
        %v1054 = vrot.slane %v437, 6
        %v1055 = vsel %vm997, %v1053, %v1054
        %v1056 = vrot.slane %v1054, 4
        %v1057 = vrot.slane %v296, 6
        %v1058 = vsel %vm997, %v1056, %v1057
        %v1059 = vrot.slane %v1057, 4
        %v1060 = vrot.slane %v449, 6
        %v1061 = vsel %vm997, %v1059, %v1060
        %v1062 = vrot.slane %v297, 6
        %v1063 = vrot.slane %v1062, 4
        %v1064 = vrot.slane %v438, 6
        %v1065 = vsel %vm997, %v1063, %v1064
        %v1066 = vrot.slane %v1064, 4
        %v1067 = vrot.slane %v298, 6
        %v1068 = vsel %vm997, %v1066, %v1067
        %v1069 = vrot.slane %v1067, 4
        %v1070 = vrot.slane %v439, 6
        %v1071 = vsel %vm997, %v1069, %v1070
        %v1072 = vrot.slane %v1070, 4
        %v1073 = vrot.slane %v299, 6
        %v1074 = vsel %vm997, %v1072, %v1073
        %v1075 = vrot.slane %v1073, 4
        %v1076 = vrot.slane %v450, 6
        %v1077 = vsel %vm997, %v1075, %v1076
        %v1078 = vrot.slane %v300, 6
        %v1079 = vrot.slane %v1078, 4
        %v1080 = vrot.slane %v440, 6
        %v1081 = vsel %vm997, %v1079, %v1080
        %v1082 = vrot.slane %v1080, 4
        %v1083 = vrot.slane %v301, 6
        %v1084 = vsel %vm997, %v1082, %v1083
        %v1085 = vrot.slane %v1083, 4
        %v1086 = vrot.slane %v441, 6
        %v1087 = vsel %vm997, %v1085, %v1086
        %v1088 = vrot.slane %v1086, 4
        %v1089 = vrot.slane %v302, 6
        %v1090 = vsel %vm997, %v1088, %v1089
        %v1091 = vrot.slane %v1089, 4
        %v1092 = vrot.slane %v451, 6
        %v1093 = vsel %vm997, %v1091, %v1092
        %v1094 = vrot.slane %v303, 6
        %v1095 = vrot.slane %v1094, 4
        %v1096 = vrot.slane %v442, 6
        %v1097 = vsel %vm997, %v1095, %v1096
        %v1098 = vrot.slane %v1096, 4
        %v1099 = vrot.slane %v304, 6
        %v1100 = vsel %vm997, %v1098, %v1099
        %v1101 = vrot.slane %v1099, 4
        %v1102 = vrot.slane %v443, 6
        %v1103 = vsel %vm997, %v1101, %v1102
        %v1104 = vrot.slane %v1102, 4
        %v1105 = vrot.slane %v305, 6
        %v1106 = vsel %vm997, %v1104, %v1105
        %v1107 = vrot.slane %v1105, 4
        %v1108 = vrot.slane %v452, 6
        %v1109 = vsel %vm997, %v1107, %v1108
        %v1110 = vrot.slane %v306, 6
        %v1111 = vrot.slane %v1110, 4
        %v1112 = vrot.slane %v444, 6
        %v1113 = vsel %vm997, %v1111, %v1112
        %v1114 = vrot.slane %v1112, 4
        %v1115 = vrot.slane %v307, 6
        %v1116 = vsel %vm997, %v1114, %v1115
        %v1117 = vrot.slane %v1115, 4
        %v1118 = vrot.slane %v445, 6
        %v1119 = vsel %vm997, %v1117, %v1118
        %v1120 = vrot.slane %v1118, 4
        %v1121 = vrot.slane %v308, 6
        %v1122 = vsel %vm997, %v1120, %v1121
        %v1123 = vrot.slane %v1121, 4
        %v1124 = vrot.slane %v453, 6
        %v1125 = vsel %vm997, %v1123, %v1124
        %v1126 = vcombine.low %v1001, %v1004
        %v1127 = vcombine.low %v1007, %v1010
        %v1128 = vcombine.low %v1013, %v1017
        %v1129 = vcombine.low %v1020, %v1023
        %v1130 = vcombine.low %v1026, %v1029
        %v1131 = vcombine.low %v1033, %v1036
        %v1132 = vcombine.low %v1039, %v1042
        %v1133 = vcombine.low %v1045, %v1049
        %v1134 = vcombine.low %v1052, %v1055
        %v1135 = vcombine.low %v1058, %v1061
        %v1136 = vcombine.low %v1065, %v1068
        %v1137 = vcombine.low %v1071, %v1074
        %v1138 = vcombine.low %v1077, %v1081
        %v1139 = vcombine.low %v1084, %v1087
        %v1140 = vcombine.low %v1090, %v1093
        %v1141 = vcombine.low %v1097, %v1100
        %v1142 = vcombine.low %v1103, %v1106
        %v1143 = vcombine.low %v1109, %v1113
        %v1144 = vcombine.low %v1116, %v1119
        %v1145 = vcombine.low %v1122, %v1125
        %1166 = vmatprep.subr.mxu0 0.0
        %1167 = vmatpush1.msra.mxu0 %v356
        %1168 = vmatprep.subr.mxu0 0.0
        %1169 = vmatpush1.msra.mxu0 %v355
        %1170 = vmatprep.subr.mxu0 0.0
        %1171 = vmatpush1.msra.mxu0 %v354
        %1172 = vmatprep.subr.mxu0 0.0
        %1173 = vmatpush1.msra.mxu0 %v353
        %1174 = vmatprep.subr.mxu0 0.0
        %1175 = vmatpush1.msra.mxu0 %v352
        %1176 = vmatprep.subr.mxu0 0.0
        %1177 = vmatpush1.msra.mxu0 %v351
        %1178 = vmatprep.subr.mxu0 0.0
        %1179 = vmatpush1.msra.mxu0 %v350
        %1180 = vmatprep.subr.mxu0 0.0
        %1181 = vmatpush1.msra.mxu0 %v349
        %1182 = vmatprep.subr.mxu0 0.0
        %1183 = vmatpush1.msra.mxu0 %v348
        %1184 = vmatprep.subr.mxu0 0.0
        %1185 = vmatpush1.msra.mxu0 %v347
        %1186 = vmatprep.subr.mxu0 0.0
        %1187 = vmatpush1.msra.mxu0 %v346
        %1188 = vmatprep.subr.mxu0 0.0
        %1189 = vmatpush1.msra.mxu0 %v345
        %1190 = vmatprep.subr.mxu0 0.0
        %1191 = vmatpush1.msra.mxu0 %v344
        %1192 = vmatprep.subr.mxu0 0.0
        %1193 = vmatpush1.msra.mxu0 %v343
        %1194 = vmatprep.subr.mxu0 0.0
        %1195 = vmatpush1.msra.mxu0 %v342
        %1196 = vmatprep.subr.mxu0 0.0
        %1197 = vmatpush1.msra.mxu0 %v341
        %1198 = vmatprep.subr.mxu0 0.0
        %1199 = vmatpush2.msra.mxu0 0.0
        %1200 = vmatprep.subr.mxu0 0.0
        %1201 = vmatpush2.msra.mxu0 0.0
        %1202 = vmatprep.subr.mxu0 0.0
        %1203 = vmatpush2.msra.mxu0 0.0
        %1204 = vmatprep.subr.mxu0 0.0
        %1205 = vmatpush2.msra.mxu0 0.0
        %1206 = vmatprep.subr.mxu0 0.0
        %1207 = vmatpush2.msra.mxu0 0.0
        %1208 = vmatprep.subr.mxu0 0.0
        %1209 = vmatpush2.msra.mxu0 0.0
        %1210 = vmatprep.subr.mxu0 0.0
        %1211 = vmatpush2.msra.mxu0 0.0
        %1212 = vmatprep.subr.mxu0 0.0
        %1213 = vmatpush2.msra.mxu0 0.0
        %1214 = vmatprep.subr.mxu0 0.0
        %1215 = vmatpush2.msra.mxu0 0.0
        %1216 = vmatprep.subr.mxu0 0.0
        %1217 = vmatpush2.msra.mxu0 0.0
        %1218 = vmatprep.subr.mxu0 0.0
        %1219 = vmatpush2.msra.mxu0 0.0
        %1220 = vmatprep.subr.mxu0 0.0
        %1221 = vmatpush2.msra.mxu0 0.0
        %1222 = vmatprep.subr.mxu0 0.0
        %1223 = vmatpush2.msra.mxu0 0.0
        %1224 = vmatprep.subr.mxu0 0.0
        %1225 = vmatpush2.msra.mxu0 0.0
        %1226 = vmatprep.subr.mxu0 0.0
        %1227 = vmatpush2.msra.mxu0 0.0
        %1228 = vmatprep.subr.mxu0 0.0
        %1229 = vmatpush2.msra.mxu0 0.0
        %1230 = vmatprep.mubr.f32.mxu0 0.0
        %1231 = vmatmul.mubr.f32.gmra.mxu0 %v1126
        %v1232 = vpop.f32.mrf.mxu0
        %v1233 = vadd.f32 0.0, %v1232
        %v1234 = vpop.f32.mrf.mxu0
        %1235 = vmatprep.mubr.f32.mxu0 0.0
        %1236 = vmatmul.mubr.f32.gmra.mxu0 %v1127
        %v1237 = vpop.f32.mrf.mxu0
        %v1238 = vadd.f32 0.0, %v1237
        %v1239 = vpop.f32.mrf.mxu0
        %1240 = vmatprep.mubr.f32.mxu0 0.0
        %1241 = vmatmul.mubr.f32.gmra.mxu0 %v1128
        %v1242 = vpop.f32.mrf.mxu0
        %v1243 = vadd.f32 0.0, %v1242
        %v1244 = vpop.f32.mrf.mxu0
        %1245 = vmatprep.mubr.f32.mxu0 0.0
        %1246 = vmatmul.mubr.f32.gmra.mxu0 %v1129
        %v1247 = vpop.f32.mrf.mxu0
        %v1248 = vadd.f32 0.0, %v1247
        %v1249 = vpop.f32.mrf.mxu0
        %1250 = vmatprep.mubr.f32.mxu0 0.0
        %1251 = vmatmul.mubr.f32.gmra.mxu0 %v1130
        %v1252 = vpop.f32.mrf.mxu0
        %v1253 = vadd.f32 0.0, %v1252
        %v1254 = vpop.f32.mrf.mxu0
        %1255 = vmatprep.mubr.f32.mxu0 0.0
        %1256 = vmatmul.mubr.f32.gmra.mxu0 %v1131
        %v1257 = vpop.f32.mrf.mxu0
        %v1258 = vadd.f32 0.0, %v1257
        %v1259 = vpop.f32.mrf.mxu0
        %1260 = vmatprep.mubr.f32.mxu0 0.0
        %1261 = vmatmul.mubr.f32.gmra.mxu0 %v1132
        %v1262 = vpop.f32.mrf.mxu0
        %v1263 = vadd.f32 0.0, %v1262
        %v1264 = vpop.f32.mrf.mxu0
        %1265 = vmatprep.mubr.f32.mxu0 0.0
        %1266 = vmatmul.mubr.f32.gmra.mxu0 %v1133
        %v1267 = vpop.f32.mrf.mxu0
        %v1268 = vadd.f32 0.0, %v1267
        %v1269 = vpop.f32.mrf.mxu0
        %1270 = vmatprep.mubr.f32.mxu0 0.0
        %1271 = vmatmul.mubr.f32.gmra.mxu0 %v1134
        %v1272 = vpop.f32.mrf.mxu0
        %v1273 = vadd.f32 0.0, %v1272
        %v1274 = vpop.f32.mrf.mxu0
        %1275 = vmatprep.mubr.f32.mxu0 0.0
        %1276 = vmatmul.mubr.f32.gmra.mxu0 %v1135
        %v1277 = vpop.f32.mrf.mxu0
        %v1278 = vadd.f32 0.0, %v1277
        %v1279 = vpop.f32.mrf.mxu0
        %1280 = vmatprep.mubr.f32.mxu0 0.0
        %1281 = vmatmul.mubr.f32.gmra.mxu0 %v1136
        %v1282 = vpop.f32.mrf.mxu0
        %v1283 = vadd.f32 0.0, %v1282
        %v1284 = vpop.f32.mrf.mxu0
        %1285 = vmatprep.mubr.f32.mxu0 0.0
        %1286 = vmatmul.mubr.f32.gmra.mxu0 %v1137
        %v1287 = vpop.f32.mrf.mxu0
        %v1288 = vadd.f32 0.0, %v1287
        %v1289 = vpop.f32.mrf.mxu0
        %1290 = vmatprep.mubr.f32.mxu0 0.0
        %1291 = vmatmul.mubr.f32.gmra.mxu0 %v1138
        %v1292 = vpop.f32.mrf.mxu0
        %v1293 = vadd.f32 0.0, %v1292
        %v1294 = vpop.f32.mrf.mxu0
        %1295 = vmatprep.mubr.f32.mxu0 0.0
        %1296 = vmatmul.mubr.f32.gmra.mxu0 %v1139
        %v1297 = vpop.f32.mrf.mxu0
        %v1298 = vadd.f32 0.0, %v1297
        %v1299 = vpop.f32.mrf.mxu0
        %1300 = vmatprep.mubr.f32.mxu0 0.0
        %1301 = vmatmul.mubr.f32.gmra.mxu0 %v1140
        %v1302 = vpop.f32.mrf.mxu0
        %v1303 = vadd.f32 0.0, %v1302
        %v1304 = vpop.f32.mrf.mxu0
        %1305 = vmatprep.mubr.f32.mxu0 0.0
        %1306 = vmatmul.mubr.f32.gmra.mxu0 %v1141
        %v1307 = vpop.f32.mrf.mxu0
        %v1308 = vadd.f32 0.0, %v1307
        %v1309 = vpop.f32.mrf.mxu0
        %1310 = vmatprep.mubr.f32.mxu0 0.0
        %1311 = vmatmul.mubr.f32.gmra.mxu0 %v1142
        %v1312 = vpop.f32.mrf.mxu0
        %v1313 = vadd.f32 0.0, %v1312
        %v1314 = vpop.f32.mrf.mxu0
        %1315 = vmatprep.mubr.f32.mxu0 0.0
        %1316 = vmatmul.mubr.f32.gmra.mxu0 %v1143
        %v1317 = vpop.f32.mrf.mxu0
        %v1318 = vadd.f32 0.0, %v1317
        %v1319 = vpop.f32.mrf.mxu0
        %1320 = vmatprep.mubr.f32.mxu0 0.0
        %1321 = vmatmul.mubr.f32.gmra.mxu0 %v1144
        %v1322 = vpop.f32.mrf.mxu0
        %v1323 = vadd.f32 0.0, %v1322
        %v1324 = vpop.f32.mrf.mxu0
        %1325 = vmatprep.mubr.f32.mxu0 0.0
        %1326 = vmatmul.mubr.f32.gmra.mxu0 %v1145
        %v1327 = vpop.f32.mrf.mxu0
        %v1328 = vadd.f32 0.0, %v1327
        %v1329 = vpop.f32.mrf.mxu0
        %1330 = vdwg.mxu0
        %v1331 = vadd.f32 %v897, %v1233
        %v1332 = vadd.f32 %v902, %v1238
        %v1333 = vadd.f32 %v907, %v1243
        %v1334 = vadd.f32 %v912, %v1248
        %v1335 = vadd.f32 %v917, %v1253
        %v1336 = vadd.f32 %v922, %v1258
        %v1337 = vadd.f32 %v927, %v1263
        %v1338 = vadd.f32 %v932, %v1268
        %v1339 = vadd.f32 %v937, %v1273
        %v1340 = vadd.f32 %v942, %v1278
        %v1341 = vadd.f32 %v947, %v1283
        %v1342 = vadd.f32 %v952, %v1288
        %v1343 = vadd.f32 %v957, %v1293
        %v1344 = vadd.f32 %v962, %v1298
        %v1345 = vadd.f32 %v967, %v1303
        %v1346 = vadd.f32 %v972, %v1308
        %v1347 = vadd.f32 %v977, %v1313
        %v1348 = vadd.f32 %v982, %v1318
        %v1349 = vadd.f32 %v987, %v1323
        %v1350 = vadd.f32 %v992, %v1328
        %vm1351 = vcmask 1040384
        %vm1352 = vcmask 1044484
        %vm1353 = vmor %vm1351, %vm1352
        %v1354 = vrot.slane %v285, 7
        %v1355 = vrot.slane %v1354, 4
        %v1356 = vrot.slane %v430, 7
        %v1357 = vsel %vm1353, %v1355, %v1356
        %v1358 = vrot.slane %v1356, 4
        %v1359 = vrot.slane %v286, 7
        %v1360 = vsel %vm1353, %v1358, %v1359
        %v1361 = vrot.slane %v1359, 4
        %v1362 = vrot.slane %v431, 7
        %v1363 = vsel %vm1353, %v1361, %v1362
        %v1364 = vrot.slane %v1362, 4
        %v1365 = vrot.slane %v287, 7
        %v1366 = vsel %vm1353, %v1364, %v1365
        %v1367 = vrot.slane %v1365, 4
        %v1368 = vrot.slane %v446, 7
        %v1369 = vsel %vm1353, %v1367, %v1368
        %v1370 = vrot.slane %v288, 7
        %v1371 = vrot.slane %v1370, 4
        %v1372 = vrot.slane %v432, 7
        %v1373 = vsel %vm1353, %v1371, %v1372
        %v1374 = vrot.slane %v1372, 4
        %v1375 = vrot.slane %v289, 7
        %v1376 = vsel %vm1353, %v1374, %v1375
        %v1377 = vrot.slane %v1375, 4
        %v1378 = vrot.slane %v433, 7
        %v1379 = vsel %vm1353, %v1377, %v1378
        %v1380 = vrot.slane %v1378, 4
        %v1381 = vrot.slane %v290, 7
        %v1382 = vsel %vm1353, %v1380, %v1381
        %v1383 = vrot.slane %v1381, 4
        %v1384 = vrot.slane %v447, 7
        %v1385 = vsel %vm1353, %v1383, %v1384
        %v1386 = vrot.slane %v291, 7
        %v1387 = vrot.slane %v1386, 4
        %v1388 = vrot.slane %v434, 7
        %v1389 = vsel %vm1353, %v1387, %v1388
        %v1390 = vrot.slane %v1388, 4
        %v1391 = vrot.slane %v292, 7
        %v1392 = vsel %vm1353, %v1390, %v1391
        %v1393 = vrot.slane %v1391, 4
        %v1394 = vrot.slane %v435, 7
        %v1395 = vsel %vm1353, %v1393, %v1394
        %v1396 = vrot.slane %v1394, 4
        %v1397 = vrot.slane %v293, 7
        %v1398 = vsel %vm1353, %v1396, %v1397
        %v1399 = vrot.slane %v1397, 4
        %v1400 = vrot.slane %v448, 7
        %v1401 = vsel %vm1353, %v1399, %v1400
        %v1402 = vrot.slane %v294, 7
        %v1403 = vrot.slane %v1402, 4
        %v1404 = vrot.slane %v436, 7
        %v1405 = vsel %vm1353, %v1403, %v1404
        %v1406 = vrot.slane %v1404, 4
        %v1407 = vrot.slane %v295, 7
        %v1408 = vsel %vm1353, %v1406, %v1407
        %v1409 = vrot.slane %v1407, 4
        %v1410 = vrot.slane %v437, 7
        %v1411 = vsel %vm1353, %v1409, %v1410
        %v1412 = vrot.slane %v1410, 4
        %v1413 = vrot.slane %v296, 7
        %v1414 = vsel %vm1353, %v1412, %v1413
        %v1415 = vrot.slane %v1413, 4
        %v1416 = vrot.slane %v449, 7
        %v1417 = vsel %vm1353, %v1415, %v1416
        %v1418 = vrot.slane %v297, 7
        %v1419 = vrot.slane %v1418, 4
        %v1420 = vrot.slane %v438, 7
        %v1421 = vsel %vm1353, %v1419, %v1420
        %v1422 = vrot.slane %v1420, 4
        %v1423 = vrot.slane %v298, 7
        %v1424 = vsel %vm1353, %v1422, %v1423
        %v1425 = vrot.slane %v1423, 4
        %v1426 = vrot.slane %v439, 7
        %v1427 = vsel %vm1353, %v1425, %v1426
        %v1428 = vrot.slane %v1426, 4
        %v1429 = vrot.slane %v299, 7
        %v1430 = vsel %vm1353, %v1428, %v1429
        %v1431 = vrot.slane %v1429, 4
        %v1432 = vrot.slane %v450, 7
        %v1433 = vsel %vm1353, %v1431, %v1432
        %v1434 = vrot.slane %v300, 7
        %v1435 = vrot.slane %v1434, 4
        %v1436 = vrot.slane %v440, 7
        %v1437 = vsel %vm1353, %v1435, %v1436
        %v1438 = vrot.slane %v1436, 4
        %v1439 = vrot.slane %v301, 7
        %v1440 = vsel %vm1353, %v1438, %v1439
        %v1441 = vrot.slane %v1439, 4
        %v1442 = vrot.slane %v441, 7
        %v1443 = vsel %vm1353, %v1441, %v1442
        %v1444 = vrot.slane %v1442, 4
        %v1445 = vrot.slane %v302, 7
        %v1446 = vsel %vm1353, %v1444, %v1445
        %v1447 = vrot.slane %v1445, 4
        %v1448 = vrot.slane %v451, 7
        %v1449 = vsel %vm1353, %v1447, %v1448
        %v1450 = vrot.slane %v303, 7
        %v1451 = vrot.slane %v1450, 4
        %v1452 = vrot.slane %v442, 7
        %v1453 = vsel %vm1353, %v1451, %v1452
        %v1454 = vrot.slane %v1452, 4
        %v1455 = vrot.slane %v304, 7
        %v1456 = vsel %vm1353, %v1454, %v1455
        %v1457 = vrot.slane %v1455, 4
        %v1458 = vrot.slane %v443, 7
        %v1459 = vsel %vm1353, %v1457, %v1458
        %v1460 = vrot.slane %v1458, 4
        %v1461 = vrot.slane %v305, 7
        %v1462 = vsel %vm1353, %v1460, %v1461
        %v1463 = vrot.slane %v1461, 4
        %v1464 = vrot.slane %v452, 7
        %v1465 = vsel %vm1353, %v1463, %v1464
        %v1466 = vrot.slane %v306, 7
        %v1467 = vrot.slane %v1466, 4
        %v1468 = vrot.slane %v444, 7
        %v1469 = vsel %vm1353, %v1467, %v1468
        %v1470 = vrot.slane %v1468, 4
        %v1471 = vrot.slane %v307, 7
        %v1472 = vsel %vm1353, %v1470, %v1471
        %v1473 = vrot.slane %v1471, 4
        %v1474 = vrot.slane %v445, 7
        %v1475 = vsel %vm1353, %v1473, %v1474
        %v1476 = vrot.slane %v1474, 4
        %v1477 = vrot.slane %v308, 7
        %v1478 = vsel %vm1353, %v1476, %v1477
        %v1479 = vrot.slane %v1477, 4
        %v1480 = vrot.slane %v453, 7
        %v1481 = vsel %vm1353, %v1479, %v1480
        %v1482 = vcombine.low %v1357, %v1360
        %v1483 = vcombine.low %v1363, %v1366
        %v1484 = vcombine.low %v1369, %v1373
        %v1485 = vcombine.low %v1376, %v1379
        %v1486 = vcombine.low %v1382, %v1385
        %v1487 = vcombine.low %v1389, %v1392
        %v1488 = vcombine.low %v1395, %v1398
        %v1489 = vcombine.low %v1401, %v1405
        %v1490 = vcombine.low %v1408, %v1411
        %v1491 = vcombine.low %v1414, %v1417
        %v1492 = vcombine.low %v1421, %v1424
        %v1493 = vcombine.low %v1427, %v1430
        %v1494 = vcombine.low %v1433, %v1437
        %v1495 = vcombine.low %v1440, %v1443
        %v1496 = vcombine.low %v1446, %v1449
        %v1497 = vcombine.low %v1453, %v1456
        %v1498 = vcombine.low %v1459, %v1462
        %v1499 = vcombine.low %v1465, %v1469
        %v1500 = vcombine.low %v1472, %v1475
        %v1501 = vcombine.low %v1478, %v1481
        %1522 = vmatprep.subr.mxu0 0.0
        %1523 = vmatpush1.msra.mxu0 %v372
        %1524 = vmatprep.subr.mxu0 0.0
        %1525 = vmatpush1.msra.mxu0 %v371
        %1526 = vmatprep.subr.mxu0 0.0
        %1527 = vmatpush1.msra.mxu0 %v370
        %1528 = vmatprep.subr.mxu0 0.0
        %1529 = vmatpush1.msra.mxu0 %v369
        %1530 = vmatprep.subr.mxu0 0.0
        %1531 = vmatpush1.msra.mxu0 %v368
        %1532 = vmatprep.subr.mxu0 0.0
        %1533 = vmatpush1.msra.mxu0 %v367
        %1534 = vmatprep.subr.mxu0 0.0
        %1535 = vmatpush1.msra.mxu0 %v366
        %1536 = vmatprep.subr.mxu0 0.0
        %1537 = vmatpush1.msra.mxu0 %v365
        %1538 = vmatprep.subr.mxu0 0.0
        %1539 = vmatpush1.msra.mxu0 %v364
        %1540 = vmatprep.subr.mxu0 0.0
        %1541 = vmatpush1.msra.mxu0 %v363
        %1542 = vmatprep.subr.mxu0 0.0
        %1543 = vmatpush1.msra.mxu0 %v362
        %1544 = vmatprep.subr.mxu0 0.0
        %1545 = vmatpush1.msra.mxu0 %v361
        %1546 = vmatprep.subr.mxu0 0.0
        %1547 = vmatpush1.msra.mxu0 %v360
        %1548 = vmatprep.subr.mxu0 0.0
        %1549 = vmatpush1.msra.mxu0 %v359
        %1550 = vmatprep.subr.mxu0 0.0
        %1551 = vmatpush1.msra.mxu0 %v358
        %1552 = vmatprep.subr.mxu0 0.0
        %1553 = vmatpush1.msra.mxu0 %v357
        %1554 = vmatprep.subr.mxu0 0.0
        %1555 = vmatpush2.msra.mxu0 0.0
        %1556 = vmatprep.subr.mxu0 0.0
        %1557 = vmatpush2.msra.mxu0 0.0
        %1558 = vmatprep.subr.mxu0 0.0
        %1559 = vmatpush2.msra.mxu0 0.0
        %1560 = vmatprep.subr.mxu0 0.0
        %1561 = vmatpush2.msra.mxu0 0.0
        %1562 = vmatprep.subr.mxu0 0.0
        %1563 = vmatpush2.msra.mxu0 0.0
        %1564 = vmatprep.subr.mxu0 0.0
        %1565 = vmatpush2.msra.mxu0 0.0
        %1566 = vmatprep.subr.mxu0 0.0
        %1567 = vmatpush2.msra.mxu0 0.0
        %1568 = vmatprep.subr.mxu0 0.0
        %1569 = vmatpush2.msra.mxu0 0.0
        %1570 = vmatprep.subr.mxu0 0.0
        %1571 = vmatpush2.msra.mxu0 0.0
        %1572 = vmatprep.subr.mxu0 0.0
        %1573 = vmatpush2.msra.mxu0 0.0
        %1574 = vmatprep.subr.mxu0 0.0
        %1575 = vmatpush2.msra.mxu0 0.0
        %1576 = vmatprep.subr.mxu0 0.0
        %1577 = vmatpush2.msra.mxu0 0.0
        %1578 = vmatprep.subr.mxu0 0.0
        %1579 = vmatpush2.msra.mxu0 0.0
        %1580 = vmatprep.subr.mxu0 0.0
        %1581 = vmatpush2.msra.mxu0 0.0
        %1582 = vmatprep.subr.mxu0 0.0
        %1583 = vmatpush2.msra.mxu0 0.0
        %1584 = vmatprep.subr.mxu0 0.0
        %1585 = vmatpush2.msra.mxu0 0.0
        %1586 = vmatprep.mubr.f32.mxu0 0.0
        %1587 = vmatmul.mubr.f32.gmra.mxu0 %v1482
        %v1588 = vpop.f32.mrf.mxu0
        %v1589 = vadd.f32 0.0, %v1588
        %v1590 = vpop.f32.mrf.mxu0
        %1591 = vmatprep.mubr.f32.mxu0 0.0
        %1592 = vmatmul.mubr.f32.gmra.mxu0 %v1483
        %v1593 = vpop.f32.mrf.mxu0
        %v1594 = vadd.f32 0.0, %v1593
        %v1595 = vpop.f32.mrf.mxu0
        %1596 = vmatprep.mubr.f32.mxu0 0.0
        %1597 = vmatmul.mubr.f32.gmra.mxu0 %v1484
        %v1598 = vpop.f32.mrf.mxu0
        %v1599 = vadd.f32 0.0, %v1598
        %v1600 = vpop.f32.mrf.mxu0
        %1601 = vmatprep.mubr.f32.mxu0 0.0
        %1602 = vmatmul.mubr.f32.gmra.mxu0 %v1485
        %v1603 = vpop.f32.mrf.mxu0
        %v1604 = vadd.f32 0.0, %v1603
        %v1605 = vpop.f32.mrf.mxu0
        %1606 = vmatprep.mubr.f32.mxu0 0.0
        %1607 = vmatmul.mubr.f32.gmra.mxu0 %v1486
        %v1608 = vpop.f32.mrf.mxu0
        %v1609 = vadd.f32 0.0, %v1608
        %v1610 = vpop.f32.mrf.mxu0
        %1611 = vmatprep.mubr.f32.mxu0 0.0
        %1612 = vmatmul.mubr.f32.gmra.mxu0 %v1487
        %v1613 = vpop.f32.mrf.mxu0
        %v1614 = vadd.f32 0.0, %v1613
        %v1615 = vpop.f32.mrf.mxu0
        %1616 = vmatprep.mubr.f32.mxu0 0.0
        %1617 = vmatmul.mubr.f32.gmra.mxu0 %v1488
        %v1618 = vpop.f32.mrf.mxu0
        %v1619 = vadd.f32 0.0, %v1618
        %v1620 = vpop.f32.mrf.mxu0
        %1621 = vmatprep.mubr.f32.mxu0 0.0
        %1622 = vmatmul.mubr.f32.gmra.mxu0 %v1489
        %v1623 = vpop.f32.mrf.mxu0
        %v1624 = vadd.f32 0.0, %v1623
        %v1625 = vpop.f32.mrf.mxu0
        %1626 = vmatprep.mubr.f32.mxu0 0.0
        %1627 = vmatmul.mubr.f32.gmra.mxu0 %v1490
        %v1628 = vpop.f32.mrf.mxu0
        %v1629 = vadd.f32 0.0, %v1628
        %v1630 = vpop.f32.mrf.mxu0
        %1631 = vmatprep.mubr.f32.mxu0 0.0
        %1632 = vmatmul.mubr.f32.gmra.mxu0 %v1491
        %v1633 = vpop.f32.mrf.mxu0
        %v1634 = vadd.f32 0.0, %v1633
        %v1635 = vpop.f32.mrf.mxu0
        %1636 = vmatprep.mubr.f32.mxu0 0.0
        %1637 = vmatmul.mubr.f32.gmra.mxu0 %v1492
        %v1638 = vpop.f32.mrf.mxu0
        %v1639 = vadd.f32 0.0, %v1638
        %v1640 = vpop.f32.mrf.mxu0
        %1641 = vmatprep.mubr.f32.mxu0 0.0
        %1642 = vmatmul.mubr.f32.gmra.mxu0 %v1493
        %v1643 = vpop.f32.mrf.mxu0
        %v1644 = vadd.f32 0.0, %v1643
        %v1645 = vpop.f32.mrf.mxu0
        %1646 = vmatprep.mubr.f32.mxu0 0.0
        %1647 = vmatmul.mubr.f32.gmra.mxu0 %v1494
        %v1648 = vpop.f32.mrf.mxu0
        %v1649 = vadd.f32 0.0, %v1648
        %v1650 = vpop.f32.mrf.mxu0
        %1651 = vmatprep.mubr.f32.mxu0 0.0
        %1652 = vmatmul.mubr.f32.gmra.mxu0 %v1495
        %v1653 = vpop.f32.mrf.mxu0
        %v1654 = vadd.f32 0.0, %v1653
        %v1655 = vpop.f32.mrf.mxu0
        %1656 = vmatprep.mubr.f32.mxu0 0.0
        %1657 = vmatmul.mubr.f32.gmra.mxu0 %v1496
        %v1658 = vpop.f32.mrf.mxu0
        %v1659 = vadd.f32 0.0, %v1658
        %v1660 = vpop.f32.mrf.mxu0
        %1661 = vmatprep.mubr.f32.mxu0 0.0
        %1662 = vmatmul.mubr.f32.gmra.mxu0 %v1497
        %v1663 = vpop.f32.mrf.mxu0
        %v1664 = vadd.f32 0.0, %v1663
        %v1665 = vpop.f32.mrf.mxu0
        %1666 = vmatprep.mubr.f32.mxu0 0.0
        %1667 = vmatmul.mubr.f32.gmra.mxu0 %v1498
        %v1668 = vpop.f32.mrf.mxu0
        %v1669 = vadd.f32 0.0, %v1668
        %v1670 = vpop.f32.mrf.mxu0
        %1671 = vmatprep.mubr.f32.mxu0 0.0
        %1672 = vmatmul.mubr.f32.gmra.mxu0 %v1499
        %v1673 = vpop.f32.mrf.mxu0
        %v1674 = vadd.f32 0.0, %v1673
        %v1675 = vpop.f32.mrf.mxu0
        %1676 = vmatprep.mubr.f32.mxu0 0.0
        %1677 = vmatmul.mubr.f32.gmra.mxu0 %v1500
        %v1678 = vpop.f32.mrf.mxu0
        %v1679 = vadd.f32 0.0, %v1678
        %v1680 = vpop.f32.mrf.mxu0
        %1681 = vmatprep.mubr.f32.mxu0 0.0
        %1682 = vmatmul.mubr.f32.gmra.mxu0 %v1501
        %v1683 = vpop.f32.mrf.mxu0
        %v1684 = vadd.f32 0.0, %v1683
        %v1685 = vpop.f32.mrf.mxu0
        %1686 = vdwg.mxu0
        %v1687 = vadd.f32 %v1331, %v1589
        %v1688 = vadd.f32 %v1332, %v1594
        %v1689 = vadd.f32 %v1333, %v1599
        %v1690 = vadd.f32 %v1334, %v1604
        %v1691 = vadd.f32 %v1335, %v1609
        %v1692 = vadd.f32 %v1336, %v1614
        %v1693 = vadd.f32 %v1337, %v1619
        %v1694 = vadd.f32 %v1338, %v1624
        %v1695 = vadd.f32 %v1339, %v1629
        %v1696 = vadd.f32 %v1340, %v1634
        %v1697 = vadd.f32 %v1341, %v1639
        %v1698 = vadd.f32 %v1342, %v1644
        %v1699 = vadd.f32 %v1343, %v1649
        %v1700 = vadd.f32 %v1344, %v1654
        %v1701 = vadd.f32 %v1345, %v1659
        %v1702 = vadd.f32 %v1346, %v1664
        %v1703 = vadd.f32 %v1347, %v1669
        %v1704 = vadd.f32 %v1348, %v1674
        %v1705 = vadd.f32 %v1349, %v1679
        %v1706 = vadd.f32 %v1350, %v1684
        %v1707 = vcombine.low %v430, %v286
        %v1708 = vcombine.low %v431, %v287
        %v1709 = vcombine.low %v446, %v432
        %v1710 = vcombine.low %v289, %v433
        %v1711 = vcombine.low %v290, %v447
        %v1712 = vcombine.low %v434, %v292
        %v1713 = vcombine.low %v435, %v293
        %v1714 = vcombine.low %v448, %v436
        %v1715 = vcombine.low %v295, %v437
        %v1716 = vcombine.low %v296, %v449
        %v1717 = vcombine.low %v438, %v298
        %v1718 = vcombine.low %v439, %v299
        %v1719 = vcombine.low %v450, %v440
        %v1720 = vcombine.low %v301, %v441
        %v1721 = vcombine.low %v302, %v451
        %v1722 = vcombine.low %v442, %v304
        %v1723 = vcombine.low %v443, %v305
        %v1724 = vcombine.low %v452, %v444
        %v1725 = vcombine.low %v307, %v445
        %v1726 = vcombine.low %v308, %v453
        %1747 = vmatprep.subr.mxu0 0.0
        %1748 = vmatpush1.msra.mxu0 %v388
        %1749 = vmatprep.subr.mxu0 0.0
        %1750 = vmatpush1.msra.mxu0 %v387
        %1751 = vmatprep.subr.mxu0 0.0
        %1752 = vmatpush1.msra.mxu0 %v386
        %1753 = vmatprep.subr.mxu0 0.0
        %1754 = vmatpush1.msra.mxu0 %v385
        %1755 = vmatprep.subr.mxu0 0.0
        %1756 = vmatpush1.msra.mxu0 %v384
        %1757 = vmatprep.subr.mxu0 0.0
        %1758 = vmatpush1.msra.mxu0 %v383
        %1759 = vmatprep.subr.mxu0 0.0
        %1760 = vmatpush1.msra.mxu0 %v382
        %1761 = vmatprep.subr.mxu0 0.0
        %1762 = vmatpush1.msra.mxu0 %v381
        %1763 = vmatprep.subr.mxu0 0.0
        %1764 = vmatpush1.msra.mxu0 %v380
        %1765 = vmatprep.subr.mxu0 0.0
        %1766 = vmatpush1.msra.mxu0 %v379
        %1767 = vmatprep.subr.mxu0 0.0
        %1768 = vmatpush1.msra.mxu0 %v378
        %1769 = vmatprep.subr.mxu0 0.0
        %1770 = vmatpush1.msra.mxu0 %v377
        %1771 = vmatprep.subr.mxu0 0.0
        %1772 = vmatpush1.msra.mxu0 %v376
        %1773 = vmatprep.subr.mxu0 0.0
        %1774 = vmatpush1.msra.mxu0 %v375
        %1775 = vmatprep.subr.mxu0 0.0
        %1776 = vmatpush1.msra.mxu0 %v374
        %1777 = vmatprep.subr.mxu0 0.0
        %1778 = vmatpush1.msra.mxu0 %v373
        %1779 = vmatprep.subr.mxu0 0.0
        %1780 = vmatpush2.msra.mxu0 0.0
        %1781 = vmatprep.subr.mxu0 0.0
        %1782 = vmatpush2.msra.mxu0 0.0
        %1783 = vmatprep.subr.mxu0 0.0
        %1784 = vmatpush2.msra.mxu0 0.0
        %1785 = vmatprep.subr.mxu0 0.0
        %1786 = vmatpush2.msra.mxu0 0.0
        %1787 = vmatprep.subr.mxu0 0.0
        %1788 = vmatpush2.msra.mxu0 0.0
        %1789 = vmatprep.subr.mxu0 0.0
        %1790 = vmatpush2.msra.mxu0 0.0
        %1791 = vmatprep.subr.mxu0 0.0
        %1792 = vmatpush2.msra.mxu0 0.0
        %1793 = vmatprep.subr.mxu0 0.0
        %1794 = vmatpush2.msra.mxu0 0.0
        %1795 = vmatprep.subr.mxu0 0.0
        %1796 = vmatpush2.msra.mxu0 0.0
        %1797 = vmatprep.subr.mxu0 0.0
        %1798 = vmatpush2.msra.mxu0 0.0
        %1799 = vmatprep.subr.mxu0 0.0
        %1800 = vmatpush2.msra.mxu0 0.0
        %1801 = vmatprep.subr.mxu0 0.0
        %1802 = vmatpush2.msra.mxu0 0.0
        %1803 = vmatprep.subr.mxu0 0.0
        %1804 = vmatpush2.msra.mxu0 0.0
        %1805 = vmatprep.subr.mxu0 0.0
        %1806 = vmatpush2.msra.mxu0 0.0
        %1807 = vmatprep.subr.mxu0 0.0
        %1808 = vmatpush2.msra.mxu0 0.0
        %1809 = vmatprep.subr.mxu0 0.0
        %1810 = vmatpush2.msra.mxu0 0.0
        %1811 = vmatprep.mubr.f32.mxu0 0.0
        %1812 = vmatmul.mubr.f32.gmra.mxu0 %v1707
        %v1813 = vpop.f32.mrf.mxu0
        %v1814 = vadd.f32 0.0, %v1813
        %v1815 = vpop.f32.mrf.mxu0
        %1816 = vmatprep.mubr.f32.mxu0 0.0
        %1817 = vmatmul.mubr.f32.gmra.mxu0 %v1708
        %v1818 = vpop.f32.mrf.mxu0
        %v1819 = vadd.f32 0.0, %v1818
        %v1820 = vpop.f32.mrf.mxu0
        %1821 = vmatprep.mubr.f32.mxu0 0.0
        %1822 = vmatmul.mubr.f32.gmra.mxu0 %v1709
        %v1823 = vpop.f32.mrf.mxu0
        %v1824 = vadd.f32 0.0, %v1823
        %v1825 = vpop.f32.mrf.mxu0
        %1826 = vmatprep.mubr.f32.mxu0 0.0
        %1827 = vmatmul.mubr.f32.gmra.mxu0 %v1710
        %v1828 = vpop.f32.mrf.mxu0
        %v1829 = vadd.f32 0.0, %v1828
        %v1830 = vpop.f32.mrf.mxu0
        %1831 = vmatprep.mubr.f32.mxu0 0.0
        %1832 = vmatmul.mubr.f32.gmra.mxu0 %v1711
        %v1833 = vpop.f32.mrf.mxu0
        %v1834 = vadd.f32 0.0, %v1833
        %v1835 = vpop.f32.mrf.mxu0
        %1836 = vmatprep.mubr.f32.mxu0 0.0
        %1837 = vmatmul.mubr.f32.gmra.mxu0 %v1712
        %v1838 = vpop.f32.mrf.mxu0
        %v1839 = vadd.f32 0.0, %v1838
        %v1840 = vpop.f32.mrf.mxu0
        %1841 = vmatprep.mubr.f32.mxu0 0.0
        %1842 = vmatmul.mubr.f32.gmra.mxu0 %v1713
        %v1843 = vpop.f32.mrf.mxu0
        %v1844 = vadd.f32 0.0, %v1843
        %v1845 = vpop.f32.mrf.mxu0
        %1846 = vmatprep.mubr.f32.mxu0 0.0
        %1847 = vmatmul.mubr.f32.gmra.mxu0 %v1714
        %v1848 = vpop.f32.mrf.mxu0
        %v1849 = vadd.f32 0.0, %v1848
        %v1850 = vpop.f32.mrf.mxu0
        %1851 = vmatprep.mubr.f32.mxu0 0.0
        %1852 = vmatmul.mubr.f32.gmra.mxu0 %v1715
        %v1853 = vpop.f32.mrf.mxu0
        %v1854 = vadd.f32 0.0, %v1853
        %v1855 = vpop.f32.mrf.mxu0
        %1856 = vmatprep.mubr.f32.mxu0 0.0
        %1857 = vmatmul.mubr.f32.gmra.mxu0 %v1716
        %v1858 = vpop.f32.mrf.mxu0
        %v1859 = vadd.f32 0.0, %v1858
        %v1860 = vpop.f32.mrf.mxu0
        %1861 = vmatprep.mubr.f32.mxu0 0.0
        %1862 = vmatmul.mubr.f32.gmra.mxu0 %v1717
        %v1863 = vpop.f32.mrf.mxu0
        %v1864 = vadd.f32 0.0, %v1863
        %v1865 = vpop.f32.mrf.mxu0
        %1866 = vmatprep.mubr.f32.mxu0 0.0
        %1867 = vmatmul.mubr.f32.gmra.mxu0 %v1718
        %v1868 = vpop.f32.mrf.mxu0
        %v1869 = vadd.f32 0.0, %v1868
        %v1870 = vpop.f32.mrf.mxu0
        %1871 = vmatprep.mubr.f32.mxu0 0.0
        %1872 = vmatmul.mubr.f32.gmra.mxu0 %v1719
        %v1873 = vpop.f32.mrf.mxu0
        %v1874 = vadd.f32 0.0, %v1873
        %v1875 = vpop.f32.mrf.mxu0
        %1876 = vmatprep.mubr.f32.mxu0 0.0
        %1877 = vmatmul.mubr.f32.gmra.mxu0 %v1720
        %v1878 = vpop.f32.mrf.mxu0
        %v1879 = vadd.f32 0.0, %v1878
        %v1880 = vpop.f32.mrf.mxu0
        %1881 = vmatprep.mubr.f32.mxu0 0.0
        %1882 = vmatmul.mubr.f32.gmra.mxu0 %v1721
        %v1883 = vpop.f32.mrf.mxu0
        %v1884 = vadd.f32 0.0, %v1883
        %v1885 = vpop.f32.mrf.mxu0
        %1886 = vmatprep.mubr.f32.mxu0 0.0
        %1887 = vmatmul.mubr.f32.gmra.mxu0 %v1722
        %v1888 = vpop.f32.mrf.mxu0
        %v1889 = vadd.f32 0.0, %v1888
        %v1890 = vpop.f32.mrf.mxu0
        %1891 = vmatprep.mubr.f32.mxu0 0.0
        %1892 = vmatmul.mubr.f32.gmra.mxu0 %v1723
        %v1893 = vpop.f32.mrf.mxu0
        %v1894 = vadd.f32 0.0, %v1893
        %v1895 = vpop.f32.mrf.mxu0
        %1896 = vmatprep.mubr.f32.mxu0 0.0
        %1897 = vmatmul.mubr.f32.gmra.mxu0 %v1724
        %v1898 = vpop.f32.mrf.mxu0
        %v1899 = vadd.f32 0.0, %v1898
        %v1900 = vpop.f32.mrf.mxu0
        %1901 = vmatprep.mubr.f32.mxu0 0.0
        %1902 = vmatmul.mubr.f32.gmra.mxu0 %v1725
        %v1903 = vpop.f32.mrf.mxu0
        %v1904 = vadd.f32 0.0, %v1903
        %v1905 = vpop.f32.mrf.mxu0
        %1906 = vmatprep.mubr.f32.mxu0 0.0
        %1907 = vmatmul.mubr.f32.gmra.mxu0 %v1726
        %v1908 = vpop.f32.mrf.mxu0
        %v1909 = vadd.f32 0.0, %v1908
        %v1910 = vpop.f32.mrf.mxu0
        %1911 = vdwg.mxu0
        %v1912 = vadd.f32 %v1687, %v1814
        %v1913 = vadd.f32 %v1688, %v1819
        %v1914 = vadd.f32 %v1689, %v1824
        %v1915 = vadd.f32 %v1690, %v1829
        %v1916 = vadd.f32 %v1691, %v1834
        %v1917 = vadd.f32 %v1692, %v1839
        %v1918 = vadd.f32 %v1693, %v1844
        %v1919 = vadd.f32 %v1694, %v1849
        %v1920 = vadd.f32 %v1695, %v1854
        %v1921 = vadd.f32 %v1696, %v1859
        %v1922 = vadd.f32 %v1697, %v1864
        %v1923 = vadd.f32 %v1698, %v1869
        %v1924 = vadd.f32 %v1699, %v1874
        %v1925 = vadd.f32 %v1700, %v1879
        %v1926 = vadd.f32 %v1701, %v1884
        %v1927 = vadd.f32 %v1702, %v1889
        %v1928 = vadd.f32 %v1703, %v1894
        %v1929 = vadd.f32 %v1704, %v1899
        %v1930 = vadd.f32 %v1705, %v1904
        %v1931 = vadd.f32 %v1706, %v1909
        %v1932 = vlaneseq
        %v1933 = vshrl.u32 %v1932, 7
        %v1934 = vsub.s32 0, %v1933
        %v1935 = vrot.slane %v389, %v1934
        %v1936 = vadd.f32 %v1912, %v1935
        %v1937 = vadd.f32 %v1913, %v1935
        %v1938 = vadd.f32 %v1914, %v1935
        %v1939 = vadd.f32 %v1915, %v1935
        %v1940 = vadd.f32 %v1916, %v1935
        %v1941 = vadd.f32 %v1917, %v1935
        %v1942 = vadd.f32 %v1918, %v1935
        %v1943 = vadd.f32 %v1919, %v1935
        %v1944 = vadd.f32 %v1920, %v1935
        %v1945 = vadd.f32 %v1921, %v1935
        %v1946 = vadd.f32 %v1922, %v1935
        %v1947 = vadd.f32 %v1923, %v1935
        %v1948 = vadd.f32 %v1924, %v1935
        %v1949 = vadd.f32 %v1925, %v1935
        %v1950 = vadd.f32 %v1926, %v1935
        %v1951 = vadd.f32 %v1927, %v1935
        %v1952 = vadd.f32 %v1928, %v1935
        %v1953 = vadd.f32 %v1929, %v1935
        %v1954 = vadd.f32 %v1930, %v1935
        %v1955 = vadd.f32 %v1931, %v1935
        %v1956 = vlaneseq
        %v1957 = vshrl.u32 %v1956, 7
        %v1958 = vsub.s32 1, %v1957
        %v1959 = vrot.slane %v389, %v1958
        %1960 = vmatprep.subr.mxu0 0.0
        %1961 = vmatpush1.msra.mxu0 %v405
        %1962 = vmatprep.subr.mxu0 0.0
        %1963 = vmatpush1.msra.mxu0 %v404
        %1964 = vmatprep.subr.mxu0 0.0
        %1965 = vmatpush1.msra.mxu0 %v403
        %1966 = vmatprep.subr.mxu0 0.0
        %1967 = vmatpush1.msra.mxu0 %v402
        %1968 = vmatprep.subr.mxu0 0.0
        %1969 = vmatpush1.msra.mxu0 %v401
        %1970 = vmatprep.subr.mxu0 0.0
        %1971 = vmatpush1.msra.mxu0 %v400
        %1972 = vmatprep.subr.mxu0 0.0
        %1973 = vmatpush1.msra.mxu0 %v399
        %1974 = vmatprep.subr.mxu0 0.0
        %1975 = vmatpush1.msra.mxu0 %v398
        %1976 = vmatprep.subr.mxu0 0.0
        %1977 = vmatpush1.msra.mxu0 %v397
        %1978 = vmatprep.subr.mxu0 0.0
        %1979 = vmatpush1.msra.mxu0 %v396
        %1980 = vmatprep.subr.mxu0 0.0
        %1981 = vmatpush1.msra.mxu0 %v395
        %1982 = vmatprep.subr.mxu0 0.0
        %1983 = vmatpush1.msra.mxu0 %v394
        %1984 = vmatprep.subr.mxu0 0.0
        %1985 = vmatpush1.msra.mxu0 %v393
        %1986 = vmatprep.subr.mxu0 0.0
        %1987 = vmatpush1.msra.mxu0 %v392
        %1988 = vmatprep.subr.mxu0 0.0
        %1989 = vmatpush1.msra.mxu0 %v391
        %1990 = vmatprep.subr.mxu0 0.0
        %1991 = vmatpush1.msra.mxu0 %v390
        %1992 = vmatprep.subr.mxu0 0.0
        %1993 = vmatpush2.msra.mxu0 0.0
        %1994 = vmatprep.subr.mxu0 0.0
        %1995 = vmatpush2.msra.mxu0 0.0
        %1996 = vmatprep.subr.mxu0 0.0
        %1997 = vmatpush2.msra.mxu0 0.0
        %1998 = vmatprep.subr.mxu0 0.0
        %1999 = vmatpush2.msra.mxu0 0.0
        %2000 = vmatprep.subr.mxu0 0.0
        %2001 = vmatpush2.msra.mxu0 0.0
        %2002 = vmatprep.subr.mxu0 0.0
        %2003 = vmatpush2.msra.mxu0 0.0
        %2004 = vmatprep.subr.mxu0 0.0
        %2005 = vmatpush2.msra.mxu0 0.0
        %2006 = vmatprep.subr.mxu0 0.0
        %2007 = vmatpush2.msra.mxu0 0.0
        %2008 = vmatprep.subr.mxu0 0.0
        %2009 = vmatpush2.msra.mxu0 0.0
        %2010 = vmatprep.subr.mxu0 0.0
        %2011 = vmatpush2.msra.mxu0 0.0
        %2012 = vmatprep.subr.mxu0 0.0
        %2013 = vmatpush2.msra.mxu0 0.0
        %2014 = vmatprep.subr.mxu0 0.0
        %2015 = vmatpush2.msra.mxu0 0.0
        %2016 = vmatprep.subr.mxu0 0.0
        %2017 = vmatpush2.msra.mxu0 0.0
        %2018 = vmatprep.subr.mxu0 0.0
        %2019 = vmatpush2.msra.mxu0 0.0
        %2020 = vmatprep.subr.mxu0 0.0
        %2021 = vmatpush2.msra.mxu0 0.0
        %2022 = vmatprep.subr.mxu0 0.0
        %2023 = vmatpush2.msra.mxu0 0.0
        %2024 = vmatprep.mubr.f32.mxu0 0.0
        %2025 = vmatmul.mubr.f32.gmra.mxu0 %v1936
        %v2026 = vpop.f32.mrf.mxu0
        %v2027 = vadd.f32 %v1959, %v2026
        %v2028 = vpop.f32.mrf.mxu0
        %2029 = vmatprep.mubr.f32.mxu0 0.0
        %2030 = vmatmul.mubr.f32.gmra.mxu0 %v1937
        %v2031 = vpop.f32.mrf.mxu0
        %v2032 = vadd.f32 %v1959, %v2031
        %v2033 = vpop.f32.mrf.mxu0
        %2034 = vmatprep.mubr.f32.mxu0 0.0
        %2035 = vmatmul.mubr.f32.gmra.mxu0 %v1938
        %v2036 = vpop.f32.mrf.mxu0
        %v2037 = vadd.f32 %v1959, %v2036
        %v2038 = vpop.f32.mrf.mxu0
        %2039 = vmatprep.mubr.f32.mxu0 0.0
        %2040 = vmatmul.mubr.f32.gmra.mxu0 %v1939
        %v2041 = vpop.f32.mrf.mxu0
        %v2042 = vadd.f32 %v1959, %v2041
        %v2043 = vpop.f32.mrf.mxu0
        %2044 = vmatprep.mubr.f32.mxu0 0.0
        %2045 = vmatmul.mubr.f32.gmra.mxu0 %v1940
        %v2046 = vpop.f32.mrf.mxu0
        %v2047 = vadd.f32 %v1959, %v2046
        %v2048 = vpop.f32.mrf.mxu0
        %2049 = vmatprep.mubr.f32.mxu0 0.0
        %2050 = vmatmul.mubr.f32.gmra.mxu0 %v1941
        %v2051 = vpop.f32.mrf.mxu0
        %v2052 = vadd.f32 %v1959, %v2051
        %v2053 = vpop.f32.mrf.mxu0
        %2054 = vmatprep.mubr.f32.mxu0 0.0
        %2055 = vmatmul.mubr.f32.gmra.mxu0 %v1942
        %v2056 = vpop.f32.mrf.mxu0
        %v2057 = vadd.f32 %v1959, %v2056
        %v2058 = vpop.f32.mrf.mxu0
        %2059 = vmatprep.mubr.f32.mxu0 0.0
        %2060 = vmatmul.mubr.f32.gmra.mxu0 %v1943
        %v2061 = vpop.f32.mrf.mxu0
        %v2062 = vadd.f32 %v1959, %v2061
        %v2063 = vpop.f32.mrf.mxu0
        %2064 = vmatprep.mubr.f32.mxu0 0.0
        %2065 = vmatmul.mubr.f32.gmra.mxu0 %v1944
        %v2066 = vpop.f32.mrf.mxu0
        %v2067 = vadd.f32 %v1959, %v2066
        %v2068 = vpop.f32.mrf.mxu0
        %2069 = vmatprep.mubr.f32.mxu0 0.0
        %2070 = vmatmul.mubr.f32.gmra.mxu0 %v1945
        %v2071 = vpop.f32.mrf.mxu0
        %v2072 = vadd.f32 %v1959, %v2071
        %v2073 = vpop.f32.mrf.mxu0
        %2074 = vmatprep.mubr.f32.mxu0 0.0
        %2075 = vmatmul.mubr.f32.gmra.mxu0 %v1946
        %v2076 = vpop.f32.mrf.mxu0
        %v2077 = vadd.f32 %v1959, %v2076
        %v2078 = vpop.f32.mrf.mxu0
        %2079 = vmatprep.mubr.f32.mxu0 0.0
        %2080 = vmatmul.mubr.f32.gmra.mxu0 %v1947
        %v2081 = vpop.f32.mrf.mxu0
        %v2082 = vadd.f32 %v1959, %v2081
        %v2083 = vpop.f32.mrf.mxu0
        %2084 = vmatprep.mubr.f32.mxu0 0.0
        %2085 = vmatmul.mubr.f32.gmra.mxu0 %v1948
        %v2086 = vpop.f32.mrf.mxu0
        %v2087 = vadd.f32 %v1959, %v2086
        %v2088 = vpop.f32.mrf.mxu0
        %2089 = vmatprep.mubr.f32.mxu0 0.0
        %2090 = vmatmul.mubr.f32.gmra.mxu0 %v1949
        %v2091 = vpop.f32.mrf.mxu0
        %v2092 = vadd.f32 %v1959, %v2091
        %v2093 = vpop.f32.mrf.mxu0
        %2094 = vmatprep.mubr.f32.mxu0 0.0
        %2095 = vmatmul.mubr.f32.gmra.mxu0 %v1950
        %v2096 = vpop.f32.mrf.mxu0
        %v2097 = vadd.f32 %v1959, %v2096
        %v2098 = vpop.f32.mrf.mxu0
        %2099 = vmatprep.mubr.f32.mxu0 0.0
        %2100 = vmatmul.mubr.f32.gmra.mxu0 %v1951
        %v2101 = vpop.f32.mrf.mxu0
        %v2102 = vadd.f32 %v1959, %v2101
        %v2103 = vpop.f32.mrf.mxu0
        %2104 = vmatprep.mubr.f32.mxu0 0.0
        %2105 = vmatmul.mubr.f32.gmra.mxu0 %v1952
        %v2106 = vpop.f32.mrf.mxu0
        %v2107 = vadd.f32 %v1959, %v2106
        %v2108 = vpop.f32.mrf.mxu0
        %2109 = vmatprep.mubr.f32.mxu0 0.0
        %2110 = vmatmul.mubr.f32.gmra.mxu0 %v1953
        %v2111 = vpop.f32.mrf.mxu0
        %v2112 = vadd.f32 %v1959, %v2111
        %v2113 = vpop.f32.mrf.mxu0
        %2114 = vmatprep.mubr.f32.mxu0 0.0
        %2115 = vmatmul.mubr.f32.gmra.mxu0 %v1954
        %v2116 = vpop.f32.mrf.mxu0
        %v2117 = vadd.f32 %v1959, %v2116
        %v2118 = vpop.f32.mrf.mxu0
        %2119 = vmatprep.mubr.f32.mxu0 0.0
        %2120 = vmatmul.mubr.f32.gmra.mxu0 %v1955
        %v2121 = vpop.f32.mrf.mxu0
        %v2122 = vadd.f32 %v1959, %v2121
        %v2123 = vpop.f32.mrf.mxu0
        %2124 = vdwg.mxu0
        %v2125 = vtanh.pop %v2027
        %v2126 = vtanh.pop %v2032
        %v2127 = vtanh.pop %v2037
        %v2128 = vtanh.pop %v2042
        %v2129 = vtanh.pop %v2047
        %v2130 = vtanh.pop %v2052
        %v2131 = vtanh.pop %v2057
        %v2132 = vtanh.pop %v2062
        %v2133 = vtanh.pop %v2067
        %v2134 = vtanh.pop %v2072
        %v2135 = vtanh.pop %v2077
        %v2136 = vtanh.pop %v2082
        %v2137 = vtanh.pop %v2087
        %v2138 = vtanh.pop %v2092
        %v2139 = vtanh.pop %v2097
        %v2140 = vtanh.pop %v2102
        %v2141 = vtanh.pop %v2107
        %v2142 = vtanh.pop %v2112
        %v2143 = vtanh.pop %v2117
        %v2144 = vtanh.pop %v2122
        %v2165 = vcombine.high %v1936, %v1936
        %v2166 = vcombine.high %v1937, %v1937
        %v2167 = vcombine.high %v1938, %v1938
        %v2168 = vcombine.high %v1939, %v1939
        %v2169 = vcombine.high %v1940, %v1940
        %v2170 = vcombine.high %v1941, %v1941
        %v2171 = vcombine.high %v1942, %v1942
        %v2172 = vcombine.high %v1943, %v1943
        %v2173 = vcombine.high %v1944, %v1944
        %v2174 = vcombine.high %v1945, %v1945
        %v2175 = vcombine.high %v1946, %v1946
        %v2176 = vcombine.high %v1947, %v1947
        %v2177 = vcombine.high %v1948, %v1948
        %v2178 = vcombine.high %v1949, %v1949
        %v2179 = vcombine.high %v1950, %v1950
        %v2180 = vcombine.high %v1951, %v1951
        %v2181 = vcombine.high %v1952, %v1952
        %v2182 = vcombine.high %v1953, %v1953
        %v2183 = vcombine.high %v1954, %v1954
        %v2184 = vcombine.high %v1955, %v1955
        %v2209 = vcombine.high %v2125, %v2125
        %v2210 = vcombine.high %v2126, %v2126
        %v2211 = vcombine.high %v2127, %v2127
        %v2212 = vcombine.high %v2128, %v2128
        %v2213 = vcombine.high %v2129, %v2129
        %v2214 = vcombine.high %v2130, %v2130
        %v2215 = vcombine.high %v2131, %v2131
        %v2216 = vcombine.high %v2132, %v2132
        %v2217 = vcombine.high %v2133, %v2133
        %v2218 = vcombine.high %v2134, %v2134
        %v2219 = vcombine.high %v2135, %v2135
        %v2220 = vcombine.high %v2136, %v2136
        %v2221 = vcombine.high %v2137, %v2137
        %v2222 = vcombine.high %v2138, %v2138
        %v2223 = vcombine.high %v2139, %v2139
        %v2224 = vcombine.high %v2140, %v2140
        %v2225 = vcombine.high %v2141, %v2141
        %v2226 = vcombine.high %v2142, %v2142
        %v2227 = vcombine.high %v2143, %v2143
        %v2228 = vcombine.high %v2144, %v2144
        %v2249 = vlaneseq
        %v2250 = vshrl.u32 %v2249, 7
        %v2251 = vsub.s32 2, %v2250
        %v2252 = vrot.slane %v389, %v2251
        %v2254 = vcombine.high %v2252, %v2252
        %v2256 = vmul.f32 %v2125, %v2252
        %v2257 = vmul.f32 %v2209, %v2254
        %v2258 = vmul.f32 %v2126, %v2252
        %v2259 = vmul.f32 %v2210, %v2254
        %v2260 = vmul.f32 %v2127, %v2252
        %v2261 = vmul.f32 %v2211, %v2252
        %v2262 = vmul.f32 %v2128, %v2254
        %v2263 = vmul.f32 %v2212, %v2252
        %v2264 = vmul.f32 %v2129, %v2254
        %v2265 = vmul.f32 %v2213, %v2252
        %v2266 = vmul.f32 %v2130, %v2252
        %v2267 = vmul.f32 %v2214, %v2254
        %v2268 = vmul.f32 %v2131, %v2252
        %v2269 = vmul.f32 %v2215, %v2254
        %v2270 = vmul.f32 %v2132, %v2252
        %v2271 = vmul.f32 %v2216, %v2252
        %v2272 = vmul.f32 %v2133, %v2254
        %v2273 = vmul.f32 %v2217, %v2252
        %v2274 = vmul.f32 %v2134, %v2254
        %v2275 = vmul.f32 %v2218, %v2252
        %v2276 = vmul.f32 %v2135, %v2252
        %v2277 = vmul.f32 %v2219, %v2254
        %v2278 = vmul.f32 %v2136, %v2252
        %v2279 = vmul.f32 %v2220, %v2254
        %v2280 = vmul.f32 %v2137, %v2252
        %v2281 = vmul.f32 %v2221, %v2252
        %v2282 = vmul.f32 %v2138, %v2254
        %v2283 = vmul.f32 %v2222, %v2252
        %v2284 = vmul.f32 %v2139, %v2254
        %v2285 = vmul.f32 %v2223, %v2252
        %v2286 = vmul.f32 %v2140, %v2252
        %v2287 = vmul.f32 %v2224, %v2254
        %v2288 = vmul.f32 %v2141, %v2252
        %v2289 = vmul.f32 %v2225, %v2254
        %v2290 = vmul.f32 %v2142, %v2252
        %v2291 = vmul.f32 %v2226, %v2252
        %v2292 = vmul.f32 %v2143, %v2254
        %v2293 = vmul.f32 %v2227, %v2252
        %v2294 = vmul.f32 %v2144, %v2254
        %v2295 = vmul.f32 %v2228, %v2252
        %v2328 = vcombine.low %v2256, %v2257
        %v2329 = vcombine.low %v2258, %v2259
        %v2330 = vcombine.low %v2261, %v2262
        %v2331 = vcombine.low %v2263, %v2264
        %v2332 = vcombine.low %v2266, %v2267
        %v2333 = vcombine.low %v2268, %v2269
        %v2334 = vcombine.low %v2271, %v2272
        %v2335 = vcombine.low %v2273, %v2274
        %v2336 = vcombine.low %v2276, %v2277
        %v2337 = vcombine.low %v2278, %v2279
        %v2338 = vcombine.low %v2281, %v2282
        %v2339 = vcombine.low %v2283, %v2284
        %v2340 = vcombine.low %v2286, %v2287
        %v2341 = vcombine.low %v2288, %v2289
        %v2342 = vcombine.low %v2291, %v2292
        %v2343 = vcombine.low %v2293, %v2294
        %2360 = vadd.xlane.f32.xlu0 %v2328
        %v2361 = vpop.xlane.xlu0 %2360
        %2362 = vadd.xlane.f32.xlu0 %v2329
        %v2363 = vpop.xlane.xlu0 %2362
        %vm2364 = vcmask 1043456
        %v2365 = vsel %vm2364, %v2260, 0.0
        %2366 = vadd.xlane.f32.xlu0 %v2365
        %v2367 = vpop.xlane.xlu0 %2366
        %2368 = vadd.xlane.f32.xlu0 %v2330
        %v2369 = vpop.xlane.xlu0 %2368
        %2370 = vadd.xlane.f32.xlu0 %v2331
        %v2371 = vpop.xlane.xlu0 %2370
        %v2372 = vsel %vm2364, %v2265, 0.0
        %2373 = vadd.xlane.f32.xlu0 %v2372
        %v2374 = vpop.xlane.xlu0 %2373
        %2375 = vadd.xlane.f32.xlu0 %v2332
        %v2376 = vpop.xlane.xlu0 %2375
        %2377 = vadd.xlane.f32.xlu0 %v2333
        %v2378 = vpop.xlane.xlu0 %2377
        %v2379 = vsel %vm2364, %v2270, 0.0
        %2380 = vadd.xlane.f32.xlu0 %v2379
        %v2381 = vpop.xlane.xlu0 %2380
        %2382 = vadd.xlane.f32.xlu0 %v2334
        %v2383 = vpop.xlane.xlu0 %2382
        %2384 = vadd.xlane.f32.xlu0 %v2335
        %v2385 = vpop.xlane.xlu0 %2384
        %v2386 = vsel %vm2364, %v2275, 0.0
        %2387 = vadd.xlane.f32.xlu0 %v2386
        %v2388 = vpop.xlane.xlu0 %2387
        %2389 = vadd.xlane.f32.xlu0 %v2336
        %v2390 = vpop.xlane.xlu0 %2389
        %2391 = vadd.xlane.f32.xlu0 %v2337
        %v2392 = vpop.xlane.xlu0 %2391
        %v2393 = vsel %vm2364, %v2280, 0.0
        %2394 = vadd.xlane.f32.xlu0 %v2393
        %v2395 = vpop.xlane.xlu0 %2394
        %2396 = vadd.xlane.f32.xlu0 %v2338
        %v2397 = vpop.xlane.xlu0 %2396
        %2398 = vadd.xlane.f32.xlu0 %v2339
        %v2399 = vpop.xlane.xlu0 %2398
        %v2400 = vsel %vm2364, %v2285, 0.0
        %2401 = vadd.xlane.f32.xlu0 %v2400
        %v2402 = vpop.xlane.xlu0 %2401
        %2403 = vadd.xlane.f32.xlu0 %v2340
        %v2404 = vpop.xlane.xlu0 %2403
        %2405 = vadd.xlane.f32.xlu0 %v2341
        %v2406 = vpop.xlane.xlu0 %2405
        %v2407 = vsel %vm2364, %v2290, 0.0
        %2408 = vadd.xlane.f32.xlu0 %v2407
        %v2409 = vpop.xlane.xlu0 %2408
        %2410 = vadd.xlane.f32.xlu0 %v2342
        %v2411 = vpop.xlane.xlu0 %2410
        %2412 = vadd.xlane.f32.xlu0 %v2343
        %v2413 = vpop.xlane.xlu0 %2412
        %v2414 = vsel %vm2364, %v2295, 0.0
        %2415 = vadd.xlane.f32.xlu0 %v2414
        %v2416 = vpop.xlane.xlu0 %2415
        %v2417 = vlaneseq
        %v2418 = vshrl.u32 %v2417, 7
        %v2419 = vadd.s32 %v2418, 8
        %v2420 = vadd.s32 %v2418, 16
        %vm2421 = vcmp.lt.s32.totalorder %v2418, 12
        %vm2422 = vcmp.lt.s32.totalorder %v2419, 12
        %vm2423 = vcmp.lt.s32.totalorder %v2420, 12
        %v2424 = vsel %vm2421, 1, 0
        %v2425 = vsel %vm2422, 1, 0
        %v2426 = vsel %vm2423, 1, 0
        %vm2427 = vcmp.eq.s32.totalorder %v2424, 1
        %vm2428 = vcmp.eq.s32.totalorder %v2425, 1
        %vm2429 = vcmp.eq.s32.totalorder %v2426, 1
        %v2430 = vsel %vm2427, %v2361, -1e+30
        %v2431 = vsel %vm2428, %v2363, -1e+30
        %v2432 = vsel %vm2429, %v2367, -1e+30
        %v2433 = vsel %vm2427, %v2369, -1e+30
        %v2434 = vsel %vm2428, %v2371, -1e+30
        %v2435 = vsel %vm2429, %v2374, -1e+30
        %v2436 = vsel %vm2427, %v2376, -1e+30
        %v2437 = vsel %vm2428, %v2378, -1e+30
        %v2438 = vsel %vm2429, %v2381, -1e+30
        %v2439 = vsel %vm2427, %v2383, -1e+30
        %v2440 = vsel %vm2428, %v2385, -1e+30
        %v2441 = vsel %vm2429, %v2388, -1e+30
        %v2442 = vsel %vm2427, %v2390, -1e+30
        %v2443 = vsel %vm2428, %v2392, -1e+30
        %v2444 = vsel %vm2429, %v2395, -1e+30
        %v2445 = vsel %vm2427, %v2397, -1e+30
        %v2446 = vsel %vm2428, %v2399, -1e+30
        %v2447 = vsel %vm2429, %v2402, -1e+30
        %v2448 = vsel %vm2427, %v2404, -1e+30
        %v2449 = vsel %vm2428, %v2406, -1e+30
        %v2450 = vsel %vm2429, %v2409, -1e+30
        %v2451 = vsel %vm2427, %v2411, -1e+30
        %v2452 = vsel %vm2428, %v2413, -1e+30
        %v2453 = vsel %vm2429, %v2416, -1e+30
        %v2454 = vmax.f32 %v2430, %v2431
        %v2455 = vsel %vm2364, %v2432, -inf
        %v2456 = vmax.f32 %v2454, %v2455
        %v2457 = vrot.slane %v2456, 4
        %v2458 = vmax.f32 %v2456, %v2457
        %v2459 = vrot.slane %v2458, 2
        %v2460 = vmax.f32 %v2458, %v2459
        %v2461 = vrot.slane %v2460, 1
        %v2462 = vmax.f32 %v2460, %v2461
        %v2463 = vmax.f32 %v2433, %v2434
        %v2464 = vsel %vm2364, %v2435, -inf
        %v2465 = vmax.f32 %v2463, %v2464
        %v2466 = vrot.slane %v2465, 4
        %v2467 = vmax.f32 %v2465, %v2466
        %v2468 = vrot.slane %v2467, 2
        %v2469 = vmax.f32 %v2467, %v2468
        %v2470 = vrot.slane %v2469, 1
        %v2471 = vmax.f32 %v2469, %v2470
        %v2472 = vmax.f32 %v2436, %v2437
        %v2473 = vsel %vm2364, %v2438, -inf
        %v2474 = vmax.f32 %v2472, %v2473
        %v2475 = vrot.slane %v2474, 4
        %v2476 = vmax.f32 %v2474, %v2475
        %v2477 = vrot.slane %v2476, 2
        %v2478 = vmax.f32 %v2476, %v2477
        %v2479 = vrot.slane %v2478, 1
        %v2480 = vmax.f32 %v2478, %v2479
        %v2481 = vmax.f32 %v2439, %v2440
        %v2482 = vsel %vm2364, %v2441, -inf
        %v2483 = vmax.f32 %v2481, %v2482
        %v2484 = vrot.slane %v2483, 4
        %v2485 = vmax.f32 %v2483, %v2484
        %v2486 = vrot.slane %v2485, 2
        %v2487 = vmax.f32 %v2485, %v2486
        %v2488 = vrot.slane %v2487, 1
        %v2489 = vmax.f32 %v2487, %v2488
        %v2490 = vmax.f32 %v2442, %v2443
        %v2491 = vsel %vm2364, %v2444, -inf
        %v2492 = vmax.f32 %v2490, %v2491
        %v2493 = vrot.slane %v2492, 4
        %v2494 = vmax.f32 %v2492, %v2493
        %v2495 = vrot.slane %v2494, 2
        %v2496 = vmax.f32 %v2494, %v2495
        %v2497 = vrot.slane %v2496, 1
        %v2498 = vmax.f32 %v2496, %v2497
        %v2499 = vmax.f32 %v2445, %v2446
        %v2500 = vsel %vm2364, %v2447, -inf
        %v2501 = vmax.f32 %v2499, %v2500
        %v2502 = vrot.slane %v2501, 4
        %v2503 = vmax.f32 %v2501, %v2502
        %v2504 = vrot.slane %v2503, 2
        %v2505 = vmax.f32 %v2503, %v2504
        %v2506 = vrot.slane %v2505, 1
        %v2507 = vmax.f32 %v2505, %v2506
        %v2508 = vmax.f32 %v2448, %v2449
        %v2509 = vsel %vm2364, %v2450, -inf
        %v2510 = vmax.f32 %v2508, %v2509
        %v2511 = vrot.slane %v2510, 4
        %v2512 = vmax.f32 %v2510, %v2511
        %v2513 = vrot.slane %v2512, 2
        %v2514 = vmax.f32 %v2512, %v2513
        %v2515 = vrot.slane %v2514, 1
        %v2516 = vmax.f32 %v2514, %v2515
        %v2517 = vmax.f32 %v2451, %v2452
        %v2518 = vsel %vm2364, %v2453, -inf
        %v2519 = vmax.f32 %v2517, %v2518
        %v2520 = vrot.slane %v2519, 4
        %v2521 = vmax.f32 %v2519, %v2520
        %v2522 = vrot.slane %v2521, 2
        %v2523 = vmax.f32 %v2521, %v2522
        %v2524 = vrot.slane %v2523, 1
        %v2525 = vmax.f32 %v2523, %v2524
        %v2526 = vsub.f32 %v2361, %v2462
        %v2527 = vsub.f32 %v2363, %v2462
        %v2528 = vsub.f32 %v2367, %v2462
        %v2529 = vsub.f32 %v2369, %v2471
        %v2530 = vsub.f32 %v2371, %v2471
        %v2531 = vsub.f32 %v2374, %v2471
        %v2532 = vsub.f32 %v2376, %v2480
        %v2533 = vsub.f32 %v2378, %v2480
        %v2534 = vsub.f32 %v2381, %v2480
        %v2535 = vsub.f32 %v2383, %v2489
        %v2536 = vsub.f32 %v2385, %v2489
        %v2537 = vsub.f32 %v2388, %v2489
        %v2538 = vsub.f32 %v2390, %v2498
        %v2539 = vsub.f32 %v2392, %v2498
        %v2540 = vsub.f32 %v2395, %v2498
        %v2541 = vsub.f32 %v2397, %v2507
        %v2542 = vsub.f32 %v2399, %v2507
        %v2543 = vsub.f32 %v2402, %v2507
        %v2544 = vsub.f32 %v2404, %v2516
        %v2545 = vsub.f32 %v2406, %v2516
        %v2546 = vsub.f32 %v2409, %v2516
        %v2547 = vsub.f32 %v2411, %v2525
        %v2548 = vsub.f32 %v2413, %v2525
        %v2549 = vsub.f32 %v2416, %v2525
        %v2550 = vmul.f32 %v2526, 1.442695
        %v2551 = vpow.pop %v2550
        %v2552 = vmul.f32 %v2527, 1.442695
        %v2553 = vpow.pop %v2552
        %v2554 = vmul.f32 %v2528, 1.442695
        %v2555 = vpow.pop %v2554
        %v2556 = vmul.f32 %v2529, 1.442695
        %v2557 = vpow.pop %v2556
        %v2558 = vmul.f32 %v2530, 1.442695
        %v2559 = vpow.pop %v2558
        %v2560 = vmul.f32 %v2531, 1.442695
        %v2561 = vpow.pop %v2560
        %v2562 = vmul.f32 %v2532, 1.442695
        %v2563 = vpow.pop %v2562
        %v2564 = vmul.f32 %v2533, 1.442695
        %v2565 = vpow.pop %v2564
        %v2566 = vmul.f32 %v2534, 1.442695
        %v2567 = vpow.pop %v2566
        %v2568 = vmul.f32 %v2535, 1.442695
        %v2569 = vpow.pop %v2568
        %v2570 = vmul.f32 %v2536, 1.442695
        %v2571 = vpow.pop %v2570
        %v2572 = vmul.f32 %v2537, 1.442695
        %v2573 = vpow.pop %v2572
        %v2574 = vmul.f32 %v2538, 1.442695
        %v2575 = vpow.pop %v2574
        %v2576 = vmul.f32 %v2539, 1.442695
        %v2577 = vpow.pop %v2576
        %v2578 = vmul.f32 %v2540, 1.442695
        %v2579 = vpow.pop %v2578
        %v2580 = vmul.f32 %v2541, 1.442695
        %v2581 = vpow.pop %v2580
        %v2582 = vmul.f32 %v2542, 1.442695
        %v2583 = vpow.pop %v2582
        %v2584 = vmul.f32 %v2543, 1.442695
        %v2585 = vpow.pop %v2584
        %v2586 = vmul.f32 %v2544, 1.442695
        %v2587 = vpow.pop %v2586
        %v2588 = vmul.f32 %v2545, 1.442695
        %v2589 = vpow.pop %v2588
        %v2590 = vmul.f32 %v2546, 1.442695
        %v2591 = vpow.pop %v2590
        %v2592 = vmul.f32 %v2547, 1.442695
        %v2593 = vpow.pop %v2592
        %v2594 = vmul.f32 %v2548, 1.442695
        %v2595 = vpow.pop %v2594
        %v2596 = vmul.f32 %v2549, 1.442695
        %v2597 = vpow.pop %v2596
        %v2598 = vsel %vm2427, %v2551, 0.0
        %v2599 = vsel %vm2428, %v2553, 0.0
        %v2600 = vsel %vm2429, %v2555, 0.0
        %v2601 = vsel %vm2427, %v2557, 0.0
        %v2602 = vsel %vm2428, %v2559, 0.0
        %v2603 = vsel %vm2429, %v2561, 0.0
        %v2604 = vsel %vm2427, %v2563, 0.0
        %v2605 = vsel %vm2428, %v2565, 0.0
        %v2606 = vsel %vm2429, %v2567, 0.0
        %v2607 = vsel %vm2427, %v2569, 0.0
        %v2608 = vsel %vm2428, %v2571, 0.0
        %v2609 = vsel %vm2429, %v2573, 0.0
        %v2610 = vsel %vm2427, %v2575, 0.0
        %v2611 = vsel %vm2428, %v2577, 0.0
        %v2612 = vsel %vm2429, %v2579, 0.0
        %v2613 = vsel %vm2427, %v2581, 0.0
        %v2614 = vsel %vm2428, %v2583, 0.0
        %v2615 = vsel %vm2429, %v2585, 0.0
        %v2616 = vsel %vm2427, %v2587, 0.0
        %v2617 = vsel %vm2428, %v2589, 0.0
        %v2618 = vsel %vm2429, %v2591, 0.0
        %v2619 = vsel %vm2427, %v2593, 0.0
        %v2620 = vsel %vm2428, %v2595, 0.0
        %v2621 = vsel %vm2429, %v2597, 0.0
        %v2622 = vadd.f32 %v2598, %v2599
        %v2623 = vsel %vm2364, %v2600, 0.0
        %v2624 = vadd.f32 %v2622, %v2623
        %v2625 = vrot.slane %v2624, 4
        %v2626 = vadd.f32 %v2624, %v2625
        %v2627 = vrot.slane %v2626, 2
        %v2628 = vadd.f32 %v2626, %v2627
        %v2629 = vrot.slane %v2628, 1
        %v2630 = vadd.f32 %v2628, %v2629
        %v2631 = vadd.f32 %v2601, %v2602
        %v2632 = vsel %vm2364, %v2603, 0.0
        %v2633 = vadd.f32 %v2631, %v2632
        %v2634 = vrot.slane %v2633, 4
        %v2635 = vadd.f32 %v2633, %v2634
        %v2636 = vrot.slane %v2635, 2
        %v2637 = vadd.f32 %v2635, %v2636
        %v2638 = vrot.slane %v2637, 1
        %v2639 = vadd.f32 %v2637, %v2638
        %v2640 = vadd.f32 %v2604, %v2605
        %v2641 = vsel %vm2364, %v2606, 0.0
        %v2642 = vadd.f32 %v2640, %v2641
        %v2643 = vrot.slane %v2642, 4
        %v2644 = vadd.f32 %v2642, %v2643
        %v2645 = vrot.slane %v2644, 2
        %v2646 = vadd.f32 %v2644, %v2645
        %v2647 = vrot.slane %v2646, 1
        %v2648 = vadd.f32 %v2646, %v2647
        %v2649 = vadd.f32 %v2607, %v2608
        %v2650 = vsel %vm2364, %v2609, 0.0
        %v2651 = vadd.f32 %v2649, %v2650
        %v2652 = vrot.slane %v2651, 4
        %v2653 = vadd.f32 %v2651, %v2652
        %v2654 = vrot.slane %v2653, 2
        %v2655 = vadd.f32 %v2653, %v2654
        %v2656 = vrot.slane %v2655, 1
        %v2657 = vadd.f32 %v2655, %v2656
        %v2658 = vadd.f32 %v2610, %v2611
        %v2659 = vsel %vm2364, %v2612, 0.0
        %v2660 = vadd.f32 %v2658, %v2659
        %v2661 = vrot.slane %v2660, 4
        %v2662 = vadd.f32 %v2660, %v2661
        %v2663 = vrot.slane %v2662, 2
        %v2664 = vadd.f32 %v2662, %v2663
        %v2665 = vrot.slane %v2664, 1
        %v2666 = vadd.f32 %v2664, %v2665
        %v2667 = vadd.f32 %v2613, %v2614
        %v2668 = vsel %vm2364, %v2615, 0.0
        %v2669 = vadd.f32 %v2667, %v2668
        %v2670 = vrot.slane %v2669, 4
        %v2671 = vadd.f32 %v2669, %v2670
        %v2672 = vrot.slane %v2671, 2
        %v2673 = vadd.f32 %v2671, %v2672
        %v2674 = vrot.slane %v2673, 1
        %v2675 = vadd.f32 %v2673, %v2674
        %v2676 = vadd.f32 %v2616, %v2617
        %v2677 = vsel %vm2364, %v2618, 0.0
        %v2678 = vadd.f32 %v2676, %v2677
        %v2679 = vrot.slane %v2678, 4
        %v2680 = vadd.f32 %v2678, %v2679
        %v2681 = vrot.slane %v2680, 2
        %v2682 = vadd.f32 %v2680, %v2681
        %v2683 = vrot.slane %v2682, 1
        %v2684 = vadd.f32 %v2682, %v2683
        %v2685 = vadd.f32 %v2619, %v2620
        %v2686 = vsel %vm2364, %v2621, 0.0
        %v2687 = vadd.f32 %v2685, %v2686
        %v2688 = vrot.slane %v2687, 4
        %v2689 = vadd.f32 %v2687, %v2688
        %v2690 = vrot.slane %v2689, 2
        %v2691 = vadd.f32 %v2689, %v2690
        %v2692 = vrot.slane %v2691, 1
        %v2693 = vadd.f32 %v2691, %v2692
        %v2694 = vrcp.pop %v2630
        %v2695 = vrcp.pop %v2639
        %v2696 = vrcp.pop %v2648
        %v2697 = vrcp.pop %v2657
        %v2698 = vrcp.pop %v2666
        %v2699 = vrcp.pop %v2675
        %v2700 = vrcp.pop %v2684
        %v2701 = vrcp.pop %v2693
        %v2702 = vmul.f32 %v2598, %v2694
        %v2703 = vmul.f32 %v2599, %v2694
        %v2704 = vmul.f32 %v2600, %v2694
        %v2705 = vmul.f32 %v2601, %v2695
        %v2706 = vmul.f32 %v2602, %v2695
        %v2707 = vmul.f32 %v2603, %v2695
        %v2708 = vmul.f32 %v2604, %v2696
        %v2709 = vmul.f32 %v2605, %v2696
        %v2710 = vmul.f32 %v2606, %v2696
        %v2711 = vmul.f32 %v2607, %v2697
        %v2712 = vmul.f32 %v2608, %v2697
        %v2713 = vmul.f32 %v2609, %v2697
        %v2714 = vmul.f32 %v2610, %v2698
        %v2715 = vmul.f32 %v2611, %v2698
        %v2716 = vmul.f32 %v2612, %v2698
        %v2717 = vmul.f32 %v2613, %v2699
        %v2718 = vmul.f32 %v2614, %v2699
        %v2719 = vmul.f32 %v2615, %v2699
        %v2720 = vmul.f32 %v2616, %v2700
        %v2721 = vmul.f32 %v2617, %v2700
        %v2722 = vmul.f32 %v2618, %v2700
        %v2723 = vmul.f32 %v2619, %v2701
        %v2724 = vmul.f32 %v2620, %v2701
        %v2725 = vmul.f32 %v2621, %v2701
        %v2726 = vcombine.low %v1936, %v2165
        %v2727 = vcombine.low %v1937, %v2166
        %v2728 = vcombine.low %v2167, %v1939
        %v2729 = vcombine.low %v2168, %v1940
        %v2730 = vcombine.low %v1941, %v2170
        %v2731 = vcombine.low %v1942, %v2171
        %v2732 = vcombine.low %v2172, %v1944
        %v2733 = vcombine.low %v2173, %v1945
        %v2734 = vcombine.low %v1946, %v2175
        %v2735 = vcombine.low %v1947, %v2176
        %v2736 = vcombine.low %v2177, %v1949
        %v2737 = vcombine.low %v2178, %v1950
        %v2738 = vcombine.low %v1951, %v2180
        %v2739 = vcombine.low %v1952, %v2181
        %v2740 = vcombine.low %v2182, %v1954
        %v2741 = vcombine.low %v2183, %v1955
        %v2758 = vmul.f32 %v2702, %v2726
        %v2759 = vmul.f32 %v2703, %v2727
        %v2760 = vmul.f32 %v2704, %v1938
        %v2761 = vmul.f32 %v2705, %v2728
        %v2762 = vmul.f32 %v2706, %v2729
        %v2763 = vmul.f32 %v2707, %v2169
        %v2764 = vmul.f32 %v2708, %v2730
        %v2765 = vmul.f32 %v2709, %v2731
        %v2766 = vmul.f32 %v2710, %v1943
        %v2767 = vmul.f32 %v2711, %v2732
        %v2768 = vmul.f32 %v2712, %v2733
        %v2769 = vmul.f32 %v2713, %v2174
        %v2770 = vmul.f32 %v2714, %v2734
        %v2771 = vmul.f32 %v2715, %v2735
        %v2772 = vmul.f32 %v2716, %v1948
        %v2773 = vmul.f32 %v2717, %v2736
        %v2774 = vmul.f32 %v2718, %v2737
        %v2775 = vmul.f32 %v2719, %v2179
        %v2776 = vmul.f32 %v2720, %v2738
        %v2777 = vmul.f32 %v2721, %v2739
        %v2778 = vmul.f32 %v2722, %v1953
        %v2779 = vmul.f32 %v2723, %v2740
        %v2780 = vmul.f32 %v2724, %v2741
        %v2781 = vmul.f32 %v2725, %v2184
        %v2782 = vadd.f32 %v2758, %v2759
        %v2783 = vsel %vm2364, %v2760, 0.0
        %v2784 = vadd.f32 %v2782, %v2783
        %v2785 = vrot.slane %v2784, 4
        %v2786 = vadd.f32 %v2784, %v2785
        %v2787 = vrot.slane %v2786, 2
        %v2788 = vadd.f32 %v2786, %v2787
        %v2789 = vrot.slane %v2788, 1
        %v2790 = vadd.f32 %v2788, %v2789
        %v2791 = vadd.f32 %v2761, %v2762
        %v2792 = vsel %vm2364, %v2763, 0.0
        %v2793 = vadd.f32 %v2791, %v2792
        %v2794 = vrot.slane %v2793, 4
        %v2795 = vadd.f32 %v2793, %v2794
        %v2796 = vrot.slane %v2795, 2
        %v2797 = vadd.f32 %v2795, %v2796
        %v2798 = vrot.slane %v2797, 1
        %v2799 = vadd.f32 %v2797, %v2798
        %v2800 = vadd.f32 %v2764, %v2765
        %v2801 = vsel %vm2364, %v2766, 0.0
        %v2802 = vadd.f32 %v2800, %v2801
        %v2803 = vrot.slane %v2802, 4
        %v2804 = vadd.f32 %v2802, %v2803
        %v2805 = vrot.slane %v2804, 2
        %v2806 = vadd.f32 %v2804, %v2805
        %v2807 = vrot.slane %v2806, 1
        %v2808 = vadd.f32 %v2806, %v2807
        %v2809 = vadd.f32 %v2767, %v2768
        %v2810 = vsel %vm2364, %v2769, 0.0
        %v2811 = vadd.f32 %v2809, %v2810
        %v2812 = vrot.slane %v2811, 4
        %v2813 = vadd.f32 %v2811, %v2812
        %v2814 = vrot.slane %v2813, 2
        %v2815 = vadd.f32 %v2813, %v2814
        %v2816 = vrot.slane %v2815, 1
        %v2817 = vadd.f32 %v2815, %v2816
        %v2818 = vadd.f32 %v2770, %v2771
        %v2819 = vsel %vm2364, %v2772, 0.0
        %v2820 = vadd.f32 %v2818, %v2819
        %v2821 = vrot.slane %v2820, 4
        %v2822 = vadd.f32 %v2820, %v2821
        %v2823 = vrot.slane %v2822, 2
        %v2824 = vadd.f32 %v2822, %v2823
        %v2825 = vrot.slane %v2824, 1
        %v2826 = vadd.f32 %v2824, %v2825
        %v2827 = vadd.f32 %v2773, %v2774
        %v2828 = vsel %vm2364, %v2775, 0.0
        %v2829 = vadd.f32 %v2827, %v2828
        %v2830 = vrot.slane %v2829, 4
        %v2831 = vadd.f32 %v2829, %v2830
        %v2832 = vrot.slane %v2831, 2
        %v2833 = vadd.f32 %v2831, %v2832
        %v2834 = vrot.slane %v2833, 1
        %v2835 = vadd.f32 %v2833, %v2834
        %v2836 = vadd.f32 %v2776, %v2777
        %v2837 = vsel %vm2364, %v2778, 0.0
        %v2838 = vadd.f32 %v2836, %v2837
        %v2839 = vrot.slane %v2838, 4
        %v2840 = vadd.f32 %v2838, %v2839
        %v2841 = vrot.slane %v2840, 2
        %v2842 = vadd.f32 %v2840, %v2841
        %v2843 = vrot.slane %v2842, 1
        %v2844 = vadd.f32 %v2842, %v2843
        %v2845 = vadd.f32 %v2779, %v2780
        %v2846 = vsel %vm2364, %v2781, 0.0
        %v2847 = vadd.f32 %v2845, %v2846
        %v2848 = vrot.slane %v2847, 4
        %v2849 = vadd.f32 %v2847, %v2848
        %v2850 = vrot.slane %v2849, 2
        %v2851 = vadd.f32 %v2849, %v2850
        %v2852 = vrot.slane %v2851, 1
        %v2853 = vadd.f32 %v2851, %v2852
        %vm2862 = vcmask 1041409
        %v2863 = vsel %vm2862, %v2799, %v2790
        %vm2864 = vcmask 1042434
        %v2865 = vsel %vm2864, %v2808, %v2863
        %vm2866 = vcmask 1043459
        %v2867 = vsel %vm2866, %v2817, %v2865
        %v2868 = vsel %vm1352, %v2826, %v2867
        %vm2869 = vcmask 1045509
        %v2870 = vsel %vm2869, %v2835, %v2868
        %vm2871 = vcmask 1046534
        %v2872 = vsel %vm2871, %v2844, %v2870
        %vm2873 = vcmask 1047559
        %v2874 = vsel %vm2873, %v2853, %v2872
        %2876 = vst [vmem:[%s258] sm:$0xff] %v2874
        %s2877 = sand.u32 %s120, 1
        %s2878 = scalar_lea.sflag [#allocation4], %s2877
        %s2879 = sand.u32 %s120, 1
        %s2880 = smul.addr %s2879, 8
        %s2881 = scalar_lea.vmem [#allocation10], %s2880
        // Predicated region
        $region53: #{tpu_custom_call.1} parent=35 // pred_check
          %p2882 = pneg %p130
        $region54: #{tpu_custom_call.1} parent=35 // pred_check_branch
          %2884 = sbr.rel (%p2882) target = $region56
        $region55: #{tpu_custom_call.1} parent=35 // pred_region
          %s2886 = ssub.s32 128, 128
          %2887 = vsyncadd %s2878, %s2886
          %s2888 = smul.addr %s23, 128
          %s2889 = scalar_lea.hbm %s4, %s2888
          %s2891 = sshll.u32 %s2881, 4
          %s2892 = int_to_ptr.vmem [resolvable:$true] %s2891
          %2894 = dma.vmem_to_hbm [thread:$0]  %s2892, 128, %s2889, %s2878
        $region56: #{tpu_custom_call.1} parent=35 // pred_fallthru
          _
      $region36: #{tpu_custom_call.1} parent=5 // pred_fallthru
        _
      %p2895 = scmp.le.s32.totalorder 2, %s18
      // Predicated region
      $region57: #{tpu_custom_call.1} parent=5 // pred_check
        %p2896 = pneg %p2895
      $region58: #{tpu_custom_call.1} parent=5 // pred_check_branch
        %2898 = sbr.rel (%p2896) target = $region60
      $region59: #{tpu_custom_call.1} parent=5 // pred_region
        %s2899 = ssub.s32 %s18, 2
        // Predicated region
        $region61: #{tpu_custom_call.1} parent=59 // pred_check
          %p2900 = pneg %p136
        $region62: #{tpu_custom_call.1} parent=59 // pred_check_branch
          %2902 = sbr.rel (%p2900) target = $region64
        $region63: #{tpu_custom_call.1} parent=59 // pred_region
          %s2903 = sand.u32 %s121, 1
          %s2904 = scalar_lea.sflag [#allocation4], %s2903
          %s2905 = sand.u32 %s121, 1
          %s2906 = smul.addr %s2905, 8
          %s2907 = scalar_lea.vmem [#allocation10], %s2906
          %2908 = dma.done %s2904, 128
        $region64: #{tpu_custom_call.1} parent=59 // pred_fallthru
          _
      $region60: #{tpu_custom_call.1} parent=5 // pred_fallthru
        _
    $region6: #{tpu_custom_call.1} parent=1 // loop_footer
      %s22 = sadd.s32 1, %s18
    $region7: #{tpu_custom_call.1} parent=1 // loop_footer_branch
      %17 = sbr.rel target = $region3
    $region8: #{tpu_custom_call.1} parent=1 // loop_exit
      _
    %2909 = vsyncpa [#allocation3], 1
    %s2910 = scalar_lea.sflag [#allocation3], 1
    %2911 = vsyncpa %s2910, 1
    %2912 = vsyncpa [#allocation6], 1
    %2913 = vsyncpa [#allocation9], 1
    %2914 = vsyncpa [#allocation4], 1
    %s2915 = scalar_lea.sflag [#allocation4], 1
    %2916 = vsyncpa %s2915, 1

</llo_original>
